<compile_context>
chip_gen: v7x
topology: tpu7x:2x2x1
jax: 0.10.0
libtpu: 0.0.40
codegen_flags: <defaults>
</compile_context>

<pallas_src>
import jax
import jax.numpy as jnp
from jax.experimental import pallas as pl
from jax.experimental.pallas import tpu as pltpu

# ---- synthetic "CodeBERT" config (small, deterministic) -----------------
MODEL_MAX_LENGTH = 64                      # stands in for tokenizer.model_max_length (512)
PAD_TOKEN_ID = 1                           # RoBERTa pad_token_id == padding_idx
VOCAB = 64                                 # synthetic vocab size
HIDDEN = 32                                # synthetic hidden size (real: 768)
MAX_POS = MODEL_MAX_LENGTH + PAD_TOKEN_ID + 1   # RoBERTa-style max_position_embeddings (66)
NODE_TRUNC = 16                            # truncated_token_length for node text
EDGE_TRUNC = 32                            # truncated_token_length for edge text
LN_EPS = 1e-5

# ---- kernel padding constants ---------------------------------------------
H_PAD = 128                                # hidden padded to one full lane tile (dense stores)
K_PAD = 256                                # fused-table rows (64 word + 66 pos = 130) padded to 2 lane tiles
# word rows [0, VOCAB) and position rows [VOCAB, VOCAB+MAX_POS) must be disjoint and in range,
# otherwise the OR-composed one-hot would collapse coincident hits to 1 instead of summing.
assert VOCAB + MAX_POS <= K_PAD


# ------------------------- Pallas kernel ---------------------------------
def _roberta_embed_pool_kernel(ids_ref, pos_ref, cnt_ref, table_ref,
                               type_ref, gamma_ref, beta_ref, out_ref):
    """Embed + LayerNorm + masked-mean-pool one block of BLOCK_N rows x S tokens.

    All BLOCK_N*S tokens of the block go through ONE fused bf16 one-hot matmul
    (word + position rows of the stacked table), one vectorized LayerNorm pass over
    the 128-lane-padded hidden dim, and one sublane group-sum for the masked mean
    pooling.  No per-token loop, no in-kernel selector builds.
    """
    f32 = jnp.float32

    ids = ids_ref[...]                      # (R, 1) int32 word-table row (== raw token id)
    pos = pos_ref[...]                      # (R, 1) int32 fused position row (already +VOCAB offset)
    table = table_ref[...]                  # (K_PAD, H_PAD) bf16 [word | position] table
    r = ids.shape[0]
    k_pad, h_pad = table.shape
    nb = out_ref.shape[0]
    s = r // nb

    # ---- fused one-hot gather: word + position rows in ONE bf16 MXU contraction ----
    k_lane = jax.lax.broadcasted_iota(jnp.int32, (r, k_pad), 1)
    onehot = ((k_lane == ids) | (k_lane == pos)).astype(jnp.bfloat16)   # exact 0/1 in bf16
    emb = jnp.dot(onehot, table, preferred_element_type=f32)            # (R, H_PAD) f32
    emb = emb + type_ref[...]               # constant token-type-0 embedding, added pre-LayerNorm

    # ---- LayerNorm over the real HIDDEN lanes ----
    # Padded lanes of emb / type / gamma / beta are exactly 0, so var = E[x^2] - mu^2
    # needs no lane mask.  (0.02-scale synthetic tables: no cancellation risk; checked
    # against the f32 reference below.)
    inv_h = 1.0 / HIDDEN
    mu = jnp.sum(emb, axis=-1, keepdims=True) * inv_h                   # (R, 1)
    var = jnp.sum(emb * emb, axis=-1, keepdims=True) * inv_h - mu * mu  # (R, 1)
    y = (emb - mu) * jax.lax.rsqrt(var + LN_EPS) * gamma_ref[...] + beta_ref[...]

    # ---- masked mean pooling over the sequence ----
    # Zero pad-token rows, group-sum S consecutive rows per node via a free
    # sublane-major reshape (H stays on lanes, S is a multiple of 8), then divide
    # by the non-pad count with the EUP approximate reciprocal (error ~2^-12).
    msk = (ids != PAD_TOKEN_ID).astype(f32)                             # (R, 1) 1.0 iff not pad
    sum_emb = jnp.sum((y * msk).reshape(nb, s, h_pad), axis=1)          # (Nb, H_PAD) f32
    # NaN for all-pad rows, matching the torch 0/0 behavior; padded block rows are
    # protected by the non-pad fill token in the wrapper.
    out_ref[...] = sum_emb * pl.reciprocal(cnt_ref[...], approx=True)


def _pick_block_n(n):
    """Rows per grid step: >=8 (sublane tile), <=128, aiming for >=2 grid steps so
    v7x's two TensorCores both get work under dimension_semantics=('parallel',)."""
    tgt = max(8, pl.cdiv(n, 2))
    tgt = ((tgt + 7) // 8) * 8
    return min(128, tgt)


def _run_embed_pool(ids, kernel_params):
    """pallas_call wrapper.

    Precomputes the grid-invariant integer machinery in plain JAX (flat token ids,
    RoBERTa cumsum position ids offset into the fused table, per-row non-pad counts),
    pads rows to a block multiple, and returns (N, HIDDEN) pooled embeddings.
    """
    table_bf16, type_pad, gamma_pad, beta_pad = kernel_params
    n, s = ids.shape
    block_n = _pick_block_n(n)
    n_pad = pl.cdiv(n, block_n) * block_n

    # Pad with a benign non-pad token id so padded rows never hit count == 0.
    ids_p = jnp.pad(ids, ((0, n_pad - n), (0, 0)), constant_values=2)
    not_pad = (ids_p != PAD_TOKEN_ID).astype(jnp.int32)                    # (n_pad, S)
    # RoBERTa position ids: cumsum(mask)*mask + padding_idx, offset by VOCAB into the table.
    pos_p = jnp.cumsum(not_pad, axis=1) * not_pad + (PAD_TOKEN_ID + VOCAB)
    count = jnp.sum(not_pad, axis=1, keepdims=True).astype(jnp.float32)    # (n_pad, 1)
    ids_flat = ids_p.reshape(n_pad * s, 1)                                 # flat row = node*S + token
    pos_flat = pos_p.reshape(n_pad * s, 1).astype(jnp.int32)

    # ~2x the per-step working set (bf16 one-hot + a few f32 (R, H_PAD) temporaries
    # + the fused table), floored at 16 MiB — well under v7x's 64 MiB/TC.
    r = block_n * s
    working = r * (K_PAD * 2 + 4 * H_PAD * 4) + K_PAD * H_PAD * 2
    vmem_bytes = int(min(48 * 1024 * 1024, max(16 * 1024 * 1024, 2 * working)))

    grid = (n_pad // block_n,)
    # TODO(synk): mark table/type/gamma/beta with pipeline_mode=pl.Buffered(1) (resident,
    # single-buffered) once real 768-wide table slices make their double-buffer footprint matter.
    out = pl.pallas_call(
        _roberta_embed_pool_kernel,
        out_shape=jax.ShapeDtypeStruct((n_pad, H_PAD), jnp.float32),
        grid=grid,
        in_specs=[
            pl.BlockSpec((block_n * s, 1), lambda i: (i, 0)),   # flat token ids (int32)
            pl.BlockSpec((block_n * s, 1), lambda i: (i, 0)),   # flat fused position ids (int32)
            pl.BlockSpec((block_n, 1), lambda i: (i, 0)),       # non-pad token count per row (f32)
            pl.BlockSpec((K_PAD, H_PAD), lambda i: (0, 0)),     # fused [word | pos] table (bf16)
            pl.BlockSpec((1, H_PAD), lambda i: (0, 0)),         # token-type-0 row (zero-padded f32)
            pl.BlockSpec((1, H_PAD), lambda i: (0, 0)),         # LayerNorm gamma (zero-padded)
            pl.BlockSpec((1, H_PAD), lambda i: (0, 0)),         # LayerNorm beta  (zero-padded)
        ],
        out_specs=pl.BlockSpec((block_n, H_PAD), lambda i: (i, 0)),  # lane-dense 128-wide stores
        compiler_params=pltpu.CompilerParams(
            dimension_semantics=("parallel",),
            vmem_limit_bytes=vmem_bytes,
        ),
    )(ids_flat, pos_flat, count, table_bf16, type_pad, gamma_pad, beta_pad)
    return out[:n, :HIDDEN]


# ----------------------- module-level forward -----------------------------
def _embed_feature_rows(x, trunc, kernel_params):
    """Mirrors _embed_node_text / _embed_edge_text for one feature matrix."""
    if x.shape[1] < MODEL_MAX_LENGTH:       # skip types without a text section
        return x
    idx_from = -MODEL_MAX_LENGTH
    idx_to = -MODEL_MAX_LENGTH + trunc
    ids = x[:, idx_from:idx_to].astype(jnp.int32)      # torch uses int64; int32 on TPU
    pooled = _run_embed_pool(ids, kernel_params)
    return jnp.concatenate([x[:, :-MODEL_MAX_LENGTH], pooled], axis=1)


def text_feat_embedding_forward(data, kernel_params):
    """data = {'node': {type: x}, 'edge': {type: edge_attr}} (HeteroData stand-in)."""
    nodes = {k: _embed_feature_rows(v, NODE_TRUNC, kernel_params) for k, v in data["node"].items()}
    edges = {k: _embed_feature_rows(v, EDGE_TRUNC, kernel_params) for k, v in data["edge"].items()}
    return {"node": nodes, "edge": edges}


# ----------------------- pure-JAX reference -------------------------------
def _reference_embed_pool(ids, word_tab, pos_tab, type_row, gamma, beta):
    not_pad = ids != PAD_TOKEN_ID
    pos_ids = jnp.cumsum(not_pad.astype(jnp.int32), axis=1) * not_pad + PAD_TOKEN_ID
    emb = word_tab[ids] + pos_tab[pos_ids] + type_row[0]               # (N, S, H)
    mu = emb.mean(-1, keepdims=True)
    var = ((emb - mu) ** 2).mean(-1, keepdims=True)
    emb = (emb - mu) * jax.lax.rsqrt(var + LN_EPS) * gamma[0] + beta[0]
    maskf = not_pad[..., None].astype(jnp.float32)
    return (emb * maskf).sum(1) / maskf.sum(1)


def _reference_forward_rows(x, trunc, ref_params):
    if x.shape[1] < MODEL_MAX_LENGTH:
        return x
    ids = x[:, -MODEL_MAX_LENGTH:-MODEL_MAX_LENGTH + trunc].astype(jnp.int32)
    pooled = _reference_embed_pool(ids, *ref_params)
    return jnp.concatenate([x[:, :-MODEL_MAX_LENGTH], pooled], axis=1)


# ----------------------------- setup ---------------------------------------
def init_params(key):
    """Synthetic CodeBERT-embedding params.

    Returns (kernel_params, ref_params).  Word/pos/type tables are rounded through
    bf16 once, so the kernel's bf16 MXU operand and the f32 reference see
    bit-identical table values.
    """
    k1, k2, k3, k4, k5 = jax.random.split(key, 5)
    rnd = lambda a: a.astype(jnp.bfloat16).astype(jnp.float32)
    word = rnd(0.02 * jax.random.normal(k1, (VOCAB, HIDDEN), jnp.float32))
    word = word.at[PAD_TOKEN_ID].set(0.0)                      # padding_idx row
    pos = rnd(0.02 * jax.random.normal(k2, (MAX_POS, HIDDEN), jnp.float32))
    pos = pos.at[PAD_TOKEN_ID].set(0.0)
    type_row = rnd(0.02 * jax.random.normal(k3, (1, HIDDEN), jnp.float32))
    gamma = 1.0 + 0.1 * jax.random.normal(k4, (1, HIDDEN), jnp.float32)
    beta = 0.1 * jax.random.normal(k5, (1, HIDDEN), jnp.float32)

    # fused [word | position] table (token-type handled as a post-matmul add),
    # K padded to 256 rows, hidden padded to one full 128-lane tile (zeros beyond HIDDEN)
    table = jnp.zeros((K_PAD, H_PAD), jnp.float32)
    table = table.at[:VOCAB, :HIDDEN].set(word)
    table = table.at[VOCAB:VOCAB + MAX_POS, :HIDDEN].set(pos)
    table_bf16 = table.astype(jnp.bfloat16)

    pad_h = lambda a: jnp.zeros((1, H_PAD), jnp.float32).at[:, :HIDDEN].set(a)
    kernel_params = (table_bf16, pad_h(type_row), pad_h(gamma), pad_h(beta))
    ref_params = (word, pos, type_row, gamma, beta)
    return kernel_params, ref_params


def make_feature_matrix(key, n_rows, n_prefix):
    k1, k2, k3 = jax.random.split(key, 3)
    prefix = jax.random.normal(k1, (n_rows, n_prefix), jnp.float32)
    toks = jax.random.randint(k2, (n_rows, MODEL_MAX_LENGTH), 2, VOCAB)
    pad = jax.random.bernoulli(k3, 0.3, (n_rows, MODEL_MAX_LENGTH))
    toks = jnp.where(pad, PAD_TOKEN_ID, toks)
    toks = toks.at[:, 0].set(2)            # guarantee >=1 non-pad token per row
    return jnp.concatenate([prefix, toks.astype(jnp.float32)], axis=1)


if __name__ == "__main__":
    root = jax.random.PRNGKey(0)
    kp, kn1, kn2, ke1 = jax.random.split(root, 4)
    kernel_params, ref_params = init_params(kp)

    data = {
        "node": {
            "func": make_feature_matrix(kn1, 16, 8),                         # (16, 72) has text
            "small": jax.random.normal(kn2, (16, 10), jnp.float32),          # width < max_len -> skipped
        },
        "edge": {
            ("func", "calls", "func"): make_feature_matrix(ke1, 8, 4),       # (8, 68) has text
        },
    }

    out = text_feat_embedding_forward(data, kernel_params)
    out = jax.tree_util.tree_map(jax.block_until_ready, out)

    # correctness check vs. pure-JAX reference.  2e-3 tolerance: the only intended
    # deltas are the EUP approximate reciprocal (~2^-12 rel) and the E[x^2]-mu^2
    # variance reformulation (negligible at 0.02-scale tables).
    ref = {
        "node": {k: _reference_forward_rows(v, NODE_TRUNC, ref_params) for k, v in data["node"].items()},
        "edge": {k: _reference_forward_rows(v, EDGE_TRUNC, ref_params) for k, v in data["edge"].items()},
    }
    for section in ("node", "edge"):
        for k in out[section]:
            a, b = out[section][k], ref[section][k]
            assert a.shape == b.shape, (k, a.shape, b.shape)
            assert bool(jnp.allclose(a, b, rtol=2e-3, atol=2e-3)), f"mismatch in {section}/{k}"

    print("KERNEL_OK")
</pallas_src>

<mosaic_0001>
module attributes {stable_mosaic.version = 11 : i64} {
  func.func @_roberta_embed_pool_kernel(%arg0: i32, %arg1: memref<128x1xi32, #tpu.memory_space<vmem>>, %arg2: memref<128x1xi32, #tpu.memory_space<vmem>>, %arg3: memref<8x1xf32, #tpu.memory_space<vmem>>, %arg4: memref<256x128xbf16, #tpu.memory_space<vmem>>, %arg5: memref<1x128xf32, #tpu.memory_space<vmem>>, %arg6: memref<1x128xf32, #tpu.memory_space<vmem>>, %arg7: memref<1x128xf32, #tpu.memory_space<vmem>>, %arg8: memref<8x128xf32, #tpu.memory_space<vmem>>) attributes {dimension_semantics = [#tpu.dimension_semantics<parallel>], iteration_bounds = array<i64: 2>, scalar_prefetch = 0 : i64, scratch_operands = 0 : i64, tpu.core_type = #tpu.core_type<tc>, window_params = [{transform_indices = @transform_0, window_bounds = array<i64: 128, 1>}, {transform_indices = @transform_1, window_bounds = array<i64: 128, 1>}, {transform_indices = @transform_2, window_bounds = array<i64: 8, 1>}, {pipeline_mode = #tpu.pipeline_mode<synchronous>, transform_indices = @transform_3, window_bounds = array<i64: 256, 128>}, {pipeline_mode = #tpu.pipeline_mode<synchronous>, transform_indices = @transform_4, window_bounds = array<i64: 1, 128>}, {pipeline_mode = #tpu.pipeline_mode<synchronous>, transform_indices = @transform_5, window_bounds = array<i64: 1, 128>}, {pipeline_mode = #tpu.pipeline_mode<synchronous>, transform_indices = @transform_6, window_bounds = array<i64: 1, 128>}, {transform_indices = @transform_7, window_bounds = array<i64: 8, 128>}]} {
    %c0 = arith.constant 0 : index
    %c0_0 = arith.constant 0 : index
    %0 = vector.load %arg1[%c0, %c0_0] : memref<128x1xi32, #tpu.memory_space<vmem>>, vector<128x1xi32>
    %c0_1 = arith.constant 0 : index
    %c0_2 = arith.constant 0 : index
    %1 = vector.load %arg2[%c0_1, %c0_2] : memref<128x1xi32, #tpu.memory_space<vmem>>, vector<128x1xi32>
    %c0_3 = arith.constant 0 : index
    %c0_4 = arith.constant 0 : index
    %2 = vector.load %arg4[%c0_3, %c0_4] : memref<256x128xbf16, #tpu.memory_space<vmem>>, vector<256x128xbf16>
    %3 = tpu.iota {dimensions = array<i32: 1>} : vector<128x256xi32>
    %4 = vector.broadcast %0 : vector<128x1xi32> to vector<128x256xi32>
    %5 = arith.cmpi eq, %3, %4 : vector<128x256xi32>
    %6 = vector.broadcast %1 : vector<128x1xi32> to vector<128x256xi32>
    %7 = arith.cmpi eq, %3, %6 : vector<128x256xi32>
    %8 = arith.ori %5, %7 : vector<128x256xi1>
    %9 = arith.extui %8 : vector<128x256xi1> to vector<128x256xi32>
    %10 = arith.sitofp %9 : vector<128x256xi32> to vector<128x256xf32>
    %11 = arith.truncf %10 : vector<128x256xf32> to vector<128x256xbf16>
    %cst = arith.constant dense<0.000000e+00> : vector<128x128xf32>
    %12 = tpu.matmul %11, %2, %cst {dimension_numbers = #tpu.dot_dimension_numbers<[1], [0], [0], [1], [0, 0, 1, 1], [], []>} : vector<128x256xbf16>, vector<256x128xbf16>, vector<128x128xf32> -> vector<128x128xf32>
    %c0_5 = arith.constant 0 : index
    %c0_6 = arith.constant 0 : index
    %13 = vector.load %arg5[%c0_5, %c0_6] : memref<1x128xf32, #tpu.memory_space<vmem>>, vector<1x128xf32>
    %14 = vector.broadcast %13 : vector<1x128xf32> to vector<128x128xf32>
    %15 = arith.addf %12, %14 : vector<128x128xf32>
    %cst_7 = arith.constant dense<0.000000e+00> : vector<128xf32>
    %16 = vector.multi_reduction <add>, %15, %cst_7 [1] : vector<128x128xf32> to vector<128xf32>
    %17 = vector.shape_cast %16 : vector<128xf32> to vector<128x1xf32>
    %cst_8 = arith.constant 3.125000e-02 : f32
    %18 = vector.broadcast %cst_8 : f32 to vector<128x1xf32>
    %19 = arith.mulf %17, %18 : vector<128x1xf32>
    %20 = arith.mulf %15, %15 : vector<128x128xf32>
    %cst_9 = arith.constant dense<0.000000e+00> : vector<128xf32>
    %21 = vector.multi_reduction <add>, %20, %cst_9 [1] : vector<128x128xf32> to vector<128xf32>
    %22 = vector.shape_cast %21 : vector<128xf32> to vector<128x1xf32>
    %cst_10 = arith.constant 3.125000e-02 : f32
    %23 = vector.broadcast %cst_10 : f32 to vector<128x1xf32>
    %24 = arith.mulf %22, %23 : vector<128x1xf32>
    %25 = arith.mulf %19, %19 : vector<128x1xf32>
    %26 = arith.subf %24, %25 : vector<128x1xf32>
    %27 = vector.broadcast %19 : vector<128x1xf32> to vector<128x128xf32>
    %28 = arith.subf %15, %27 : vector<128x128xf32>
    %cst_11 = arith.constant 9.99999974E-6 : f32
    %29 = vector.broadcast %cst_11 : f32 to vector<128x1xf32>
    %30 = arith.addf %26, %29 : vector<128x1xf32>
    %31 = math.rsqrt %30 : vector<128x1xf32>
    %32 = vector.broadcast %31 : vector<128x1xf32> to vector<128x128xf32>
    %33 = arith.mulf %28, %32 : vector<128x128xf32>
    %c0_12 = arith.constant 0 : index
    %c0_13 = arith.constant 0 : index
    %34 = vector.load %arg6[%c0_12, %c0_13] : memref<1x128xf32, #tpu.memory_space<vmem>>, vector<1x128xf32>
    %35 = vector.broadcast %34 : vector<1x128xf32> to vector<128x128xf32>
    %36 = arith.mulf %33, %35 : vector<128x128xf32>
    %c0_14 = arith.constant 0 : index
    %c0_15 = arith.constant 0 : index
    %37 = vector.load %arg7[%c0_14, %c0_15] : memref<1x128xf32, #tpu.memory_space<vmem>>, vector<1x128xf32>
    %38 = vector.broadcast %37 : vector<1x128xf32> to vector<128x128xf32>
    %39 = arith.addf %36, %38 : vector<128x128xf32>
    %c1_i32 = arith.constant 1 : i32
    %40 = vector.broadcast %c1_i32 : i32 to vector<128x1xi32>
    %41 = arith.cmpi ne, %0, %40 : vector<128x1xi32>
    %42 = arith.extui %41 : vector<128x1xi1> to vector<128x1xi32>
    %43 = arith.sitofp %42 : vector<128x1xi32> to vector<128x1xf32>
    %44 = vector.broadcast %43 : vector<128x1xf32> to vector<128x128xf32>
    %45 = arith.mulf %39, %44 : vector<128x128xf32>
    %46 = vector.shape_cast %45 : vector<128x128xf32> to vector<8x16x128xf32>
    %cst_16 = arith.constant dense<0.000000e+00> : vector<8x128xf32>
    %47 = vector.multi_reduction <add>, %46, %cst_16 [1] : vector<8x16x128xf32> to vector<8x128xf32>
    %c0_17 = arith.constant 0 : index
    %c0_18 = arith.constant 0 : index
    %48 = vector.load %arg3[%c0_17, %c0_18] : memref<8x1xf32, #tpu.memory_space<vmem>>, vector<8x1xf32>
    %49 = tpu.reciprocal %48 {approx = true} : vector<8x1xf32> -> vector<8x1xf32>
    %50 = vector.broadcast %49 : vector<8x1xf32> to vector<8x128xf32>
    %51 = arith.mulf %47, %50 : vector<8x128xf32>
    %c0_19 = arith.constant 0 : index
    %c0_20 = arith.constant 0 : index
    %52 = vector.load %arg8[%c0_19, %c0_20] : memref<8x128xf32, #tpu.memory_space<vmem>>, vector<8x128xf32>
    tpu.vector_store %arg8[%c0_19, %c0_20], %51 {strides = array<i32>} : memref<8x128xf32, #tpu.memory_space<vmem>>, vector<8x128xf32>,
    return
  }
  func.func @transform_0(%arg0: i32) -> (i32, i32) {
    %c0_i32 = arith.constant 0 : i32
    %c0_i32_0 = arith.constant 0 : i32
    return %arg0, %c0_i32 : i32, i32
  }
  func.func @transform_1(%arg0: i32) -> (i32, i32) {
    %c0_i32 = arith.constant 0 : i32
    %c0_i32_0 = arith.constant 0 : i32
    return %arg0, %c0_i32 : i32, i32
  }
  func.func @transform_2(%arg0: i32) -> (i32, i32) {
    %c0_i32 = arith.constant 0 : i32
    %c0_i32_0 = arith.constant 0 : i32
    return %arg0, %c0_i32 : i32, i32
  }
  func.func @transform_3(%arg0: i32) -> (i32, i32) {
    %c0_i32 = arith.constant 0 : i32
    %c0_i32_0 = arith.constant 0 : i32
    %c0_i32_1 = arith.constant 0 : i32
    return %c0_i32, %c0_i32_0 : i32, i32
  }
  func.func @transform_4(%arg0: i32) -> (i32, i32) {
    %c0_i32 = arith.constant 0 : i32
    %c0_i32_0 = arith.constant 0 : i32
    %c0_i32_1 = arith.constant 0 : i32
    return %c0_i32, %c0_i32_0 : i32, i32
  }
  func.func @transform_5(%arg0: i32) -> (i32, i32) {
    %c0_i32 = arith.constant 0 : i32
    %c0_i32_0 = arith.constant 0 : i32
    %c0_i32_1 = arith.constant 0 : i32
    return %c0_i32, %c0_i32_0 : i32, i32
  }
  func.func @transform_6(%arg0: i32) -> (i32, i32) {
    %c0_i32 = arith.constant 0 : i32
    %c0_i32_0 = arith.constant 0 : i32
    %c0_i32_1 = arith.constant 0 : i32
    return %c0_i32, %c0_i32_0 : i32, i32
  }
  func.func @transform_7(%arg0: i32) -> (i32, i32) {
    %c0_i32 = arith.constant 0 : i32
    %c0_i32_0 = arith.constant 0 : i32
    return %arg0, %c0_i32 : i32, i32
  }
}

</mosaic_0001>

<llo_original>
// kernel: tpu_custom_call.1
$region0: #{tpu_custom_call.1}
  #allocation0 [shape = 'u32[]', space=smem, size = 0x4, offset = 0x4, fixed_abs, tag = 'smem constant byte address 0x4 - core index']
  #allocation1 [shape = 'u32[144,128]{1,0:T(1,128)}', space=vmem, size = 0x12000, scoped, tag = 'internal scratch']
  %s0 = inlined_call_operand.vmem [shape: s32[256,1], index: 0, kind: input, shape index: {}]
  %s1 = inlined_call_operand.vmem [shape: s32[256,1], index: 1, kind: input, shape index: {}]
  %s2 = inlined_call_operand.vmem [shape: f32[16,1], index: 2, kind: input, shape index: {}]
  %s3 = inlined_call_operand.vmem [shape: bf16[256,128], index: 3, kind: input, shape index: {}]
  %s4 = inlined_call_operand.vmem [shape: f32[1,128], index: 4, kind: input, shape index: {}]
  %s5 = inlined_call_operand.vmem [shape: f32[1,128], index: 5, kind: input, shape index: {}]
  %s6 = inlined_call_operand.vmem [shape: f32[1,128], index: 6, kind: input, shape index: {}]
  %s7 = inlined_call_operand.hbm [shape: f32[16,128], index: 7, kind: output, shape index: {}]
  %s8 = sld [smem:[#allocation0]]
  $region61: #{tpu_custom_call.1} parent=0
    _
  %s10 = ssub.s32 1, %s8
  %s11 = scalar_select 0, %s10, %s8
  $region1: #{tpu_custom_call.1} parent=0
    #allocation2 [shape = 'u8[8192]{0}', space=vmem, size = 0x2000, scoped, tag = 'output window, operand 0']
    #allocation3 [shape = 's32[2]{0}', space=sflag, size = 0x8, scoped, tag = 'scoped memory for tpu_custom_call.1']
    %12 = vsyncpa [#allocation3], 0
    %s13 = scalar_lea.sflag [#allocation3], 1
    %14 = vsyncpa %s13, 0
    loop: start=0, step=1, limit=4
    $region2: #{tpu_custom_call.1} parent=1 // loop_pre_header
      _
    $region3: #{tpu_custom_call.1} parent=1 // loop_header
      %s16 = sphi 0, %s20
      %p17 = scmp.ge.s32.totalorder %s16, 4
      %s26 = sphi 0, %s28
      %s29 = sphi 0, %s26
      %s30 = sphi 0, %s29
      %s46 = sphi 0, %s30
      %s52 = sphi 0, %s54
      %s55 = sphi 0, %s52
      %s56 = sphi 0, %s55
      %s72 = sphi 0, %s56
      %s78 = sphi 0, %s80
      %s81 = sphi 0, %s78
      %s82 = sphi 0, %s81
      %s98 = sphi 0, %s82
      %s102 = sphi 0, %s102
      %s104 = sphi 0, %s102
      %s105 = sphi 0, %s104
      %s119 = sphi 0, %s105
      %s123 = sphi 0, %s123
      %s125 = sphi 0, %s123
      %s126 = sphi 0, %s125
      %s140 = sphi 0, %s126
      %s144 = sphi 0, %s144
      %s146 = sphi 0, %s144
      %s147 = sphi 0, %s146
      %s161 = sphi 0, %s147
      %s165 = sphi 0, %s165
      %s167 = sphi 0, %s165
      %s168 = sphi 0, %s167
      %s182 = sphi 0, %s168
      %s188 = sphi 0, %s190
      %s191 = sphi 0, %s188
      %s192 = sphi 0, %s191
      %s208 = sphi 0, %s192
    $region4: #{tpu_custom_call.1} parent=1 // loop_header_branch
      %19 = sbr.rel (%p17) target = $region8
    $region5: #{tpu_custom_call.1} parent=1 // loop_body
      %s21 = ssub.s32 %s16, 1
      %s22 = ssub.s32 %s16, 2
      %s23 = sadd.s32 %s16, 1
      %s24 = ssub.s32 %s16, %s23
      %p25 = scmp.eq.s32.totalorder %s24, 0
      %s27 = sadd.s32 %s26, 1
      %s28 = scalar_select %p25, %s26, %s27
      %p31 = pneg %p25
      %p32 = scmp.eq.s32.totalorder %s16, 1
      %p33 = por %p31, %p32
      %p34 = scmp.ne.s32.totalorder %s26, %s29
      %p35 = scmp.eq.s32.totalorder %s16, 0
      %p36 = por %p34, %p35
      %p37 = scmp.ne.s32.totalorder %s26, %s29
      %p38 = scmp.eq.s32.totalorder %s21, 1
      %p39 = por %p37, %p38
      %p40 = scmp.ne.s32.totalorder %s29, %s30
      %p41 = scmp.eq.s32.totalorder %s21, 0
      %p42 = por %p40, %p41
      %p43 = scmp.ne.s32.totalorder %s29, %s30
      %p44 = scmp.eq.s32.totalorder %s22, 1
      %p45 = por %p43, %p44
      %p47 = scmp.ne.s32.totalorder %s30, %s46
      %p48 = scmp.eq.s32.totalorder %s22, 0
      %p49 = por %p47, %p48
      %s50 = ssub.s32 %s16, %s23
      %p51 = scmp.eq.s32.totalorder %s50, 0
      %s53 = sadd.s32 %s52, 1
      %s54 = scalar_select %p51, %s52, %s53
      %p57 = pneg %p51
      %p58 = scmp.eq.s32.totalorder %s16, 1
      %p59 = por %p57, %p58
      %p60 = scmp.ne.s32.totalorder %s52, %s55
      %p61 = scmp.eq.s32.totalorder %s16, 0
      %p62 = por %p60, %p61
      %p63 = scmp.ne.s32.totalorder %s52, %s55
      %p64 = scmp.eq.s32.totalorder %s21, 1
      %p65 = por %p63, %p64
      %p66 = scmp.ne.s32.totalorder %s55, %s56
      %p67 = scmp.eq.s32.totalorder %s21, 0
      %p68 = por %p66, %p67
      %p69 = scmp.ne.s32.totalorder %s55, %s56
      %p70 = scmp.eq.s32.totalorder %s22, 1
      %p71 = por %p69, %p70
      %p73 = scmp.ne.s32.totalorder %s56, %s72
      %p74 = scmp.eq.s32.totalorder %s22, 0
      %p75 = por %p73, %p74
      %s76 = ssub.s32 %s16, %s23
      %p77 = scmp.eq.s32.totalorder %s76, 0
      %s79 = sadd.s32 %s78, 1
      %s80 = scalar_select %p77, %s78, %s79
      %p83 = pneg %p77
      %p84 = scmp.eq.s32.totalorder %s16, 1
      %p85 = por %p83, %p84
      %p86 = scmp.ne.s32.totalorder %s78, %s81
      %p87 = scmp.eq.s32.totalorder %s16, 0
      %p88 = por %p86, %p87
      %p89 = scmp.ne.s32.totalorder %s78, %s81
      %p90 = scmp.eq.s32.totalorder %s21, 1
      %p91 = por %p89, %p90
      %p92 = scmp.ne.s32.totalorder %s81, %s82
      %p93 = scmp.eq.s32.totalorder %s21, 0
      %p94 = por %p92, %p93
      %p95 = scmp.ne.s32.totalorder %s81, %s82
      %p96 = scmp.eq.s32.totalorder %s22, 1
      %p97 = por %p95, %p96
      %p99 = scmp.ne.s32.totalorder %s82, %s98
      %p100 = scmp.eq.s32.totalorder %s22, 0
      %p101 = por %p99, %p100
      %s103 = sadd.s32 %s102, 1
      %p106 = scmp.eq.s32.totalorder %s16, 1
      %p107 = scmp.ne.s32.totalorder %s102, %s104
      %p108 = scmp.eq.s32.totalorder %s16, 0
      %p109 = por %p107, %p108
      %p110 = scmp.ne.s32.totalorder %s102, %s104
      %p111 = scmp.eq.s32.totalorder %s21, 1
      %p112 = por %p110, %p111
      %p113 = scmp.ne.s32.totalorder %s104, %s105
      %p114 = scmp.eq.s32.totalorder %s21, 0
      %p115 = por %p113, %p114
      %p116 = scmp.ne.s32.totalorder %s104, %s105
      %p117 = scmp.eq.s32.totalorder %s22, 1
      %p118 = por %p116, %p117
      %p120 = scmp.ne.s32.totalorder %s105, %s119
      %p121 = scmp.eq.s32.totalorder %s22, 0
      %p122 = por %p120, %p121
      %s124 = sadd.s32 %s123, 1
      %p127 = scmp.eq.s32.totalorder %s16, 1
      %p128 = scmp.ne.s32.totalorder %s123, %s125
      %p129 = scmp.eq.s32.totalorder %s16, 0
      %p130 = por %p128, %p129
      %p131 = scmp.ne.s32.totalorder %s123, %s125
      %p132 = scmp.eq.s32.totalorder %s21, 1
      %p133 = por %p131, %p132
      %p134 = scmp.ne.s32.totalorder %s125, %s126
      %p135 = scmp.eq.s32.totalorder %s21, 0
      %p136 = por %p134, %p135
      %p137 = scmp.ne.s32.totalorder %s125, %s126
      %p138 = scmp.eq.s32.totalorder %s22, 1
      %p139 = por %p137, %p138
      %p141 = scmp.ne.s32.totalorder %s126, %s140
      %p142 = scmp.eq.s32.totalorder %s22, 0
      %p143 = por %p141, %p142
      %s145 = sadd.s32 %s144, 1
      %p148 = scmp.eq.s32.totalorder %s16, 1
      %p149 = scmp.ne.s32.totalorder %s144, %s146
      %p150 = scmp.eq.s32.totalorder %s16, 0
      %p151 = por %p149, %p150
      %p152 = scmp.ne.s32.totalorder %s144, %s146
      %p153 = scmp.eq.s32.totalorder %s21, 1
      %p154 = por %p152, %p153
      %p155 = scmp.ne.s32.totalorder %s146, %s147
      %p156 = scmp.eq.s32.totalorder %s21, 0
      %p157 = por %p155, %p156
      %p158 = scmp.ne.s32.totalorder %s146, %s147
      %p159 = scmp.eq.s32.totalorder %s22, 1
      %p160 = por %p158, %p159
      %p162 = scmp.ne.s32.totalorder %s147, %s161
      %p163 = scmp.eq.s32.totalorder %s22, 0
      %p164 = por %p162, %p163
      %s166 = sadd.s32 %s165, 1
      %p169 = scmp.eq.s32.totalorder %s16, 1
      %p170 = scmp.ne.s32.totalorder %s165, %s167
      %p171 = scmp.eq.s32.totalorder %s16, 0
      %p172 = por %p170, %p171
      %p173 = scmp.ne.s32.totalorder %s165, %s167
      %p174 = scmp.eq.s32.totalorder %s21, 1
      %p175 = por %p173, %p174
      %p176 = scmp.ne.s32.totalorder %s167, %s168
      %p177 = scmp.eq.s32.totalorder %s21, 0
      %p178 = por %p176, %p177
      %p179 = scmp.ne.s32.totalorder %s167, %s168
      %p180 = scmp.eq.s32.totalorder %s22, 1
      %p181 = por %p179, %p180
      %p183 = scmp.ne.s32.totalorder %s168, %s182
      %p184 = scmp.eq.s32.totalorder %s22, 0
      %p185 = por %p183, %p184
      %s186 = ssub.s32 %s16, %s23
      %p187 = scmp.eq.s32.totalorder %s186, 0
      %s189 = sadd.s32 %s188, 1
      %s190 = scalar_select %p187, %s188, %s189
      %p193 = pneg %p187
      %p194 = scmp.eq.s32.totalorder %s16, 1
      %p195 = por %p193, %p194
      %p196 = scmp.ne.s32.totalorder %s188, %s191
      %p197 = scmp.eq.s32.totalorder %s16, 0
      %p198 = por %p196, %p197
      %p199 = scmp.ne.s32.totalorder %s188, %s191
      %p200 = scmp.eq.s32.totalorder %s21, 1
      %p201 = por %p199, %p200
      %p202 = scmp.ne.s32.totalorder %s191, %s192
      %p203 = scmp.eq.s32.totalorder %s21, 0
      %p204 = por %p202, %p203
      %p205 = scmp.ne.s32.totalorder %s191, %s192
      %p206 = scmp.eq.s32.totalorder %s22, 1
      %p207 = por %p205, %p206
      %p209 = scmp.ne.s32.totalorder %s192, %s208
      %p210 = scmp.eq.s32.totalorder %s22, 0
      %p211 = por %p209, %p210
      %p212 = scmp.le.s32.totalorder 1, %s16
      %p213 = scmp.lt.s32.totalorder %s16, 3
      %p214 = pnand %p212, %p213
      %p215 = pneg %p214
      // Predicated region
      $region9: #{tpu_custom_call.1} parent=5 // pred_check
        _
      $region10: #{tpu_custom_call.1} parent=5 // pred_check_branch
        %217 = sbr.rel (%p214) target = $region12
      $region11: #{tpu_custom_call.1} parent=5 // pred_region
        %s218 = ssub.s32 %s16, 1
        // Predicated region
        $region13: #{tpu_custom_call.1} parent=11 // pred_check
          %p219 = pneg %p115
        $region14: #{tpu_custom_call.1} parent=11 // pred_check_branch
          %221 = sbr.rel (%p219) target = $region16
        $region15: #{tpu_custom_call.1} parent=11 // pred_region
          _
        $region16: #{tpu_custom_call.1} parent=11 // pred_fallthru
          _
        // Predicated region
        $region17: #{tpu_custom_call.1} parent=11 // pred_check
          %p222 = pneg %p136
        $region18: #{tpu_custom_call.1} parent=11 // pred_check_branch
          %224 = sbr.rel (%p222) target = $region20
        $region19: #{tpu_custom_call.1} parent=11 // pred_region
          _
        $region20: #{tpu_custom_call.1} parent=11 // pred_fallthru
          _
        // Predicated region
        $region21: #{tpu_custom_call.1} parent=11 // pred_check
          %p225 = pneg %p157
        $region22: #{tpu_custom_call.1} parent=11 // pred_check_branch
          %227 = sbr.rel (%p225) target = $region24
        $region23: #{tpu_custom_call.1} parent=11 // pred_region
          _
        $region24: #{tpu_custom_call.1} parent=11 // pred_fallthru
          _
        // Predicated region
        $region25: #{tpu_custom_call.1} parent=11 // pred_check
          %p228 = pneg %p178
        $region26: #{tpu_custom_call.1} parent=11 // pred_check_branch
          %230 = sbr.rel (%p228) target = $region28
        $region27: #{tpu_custom_call.1} parent=11 // pred_region
          _
        $region28: #{tpu_custom_call.1} parent=11 // pred_fallthru
          _
      $region12: #{tpu_custom_call.1} parent=5 // pred_fallthru
        _
      %p231 = scmp.lt.s32.totalorder %s16, 2
      // Predicated region
      $region29: #{tpu_custom_call.1} parent=5 // pred_check
        %p232 = pneg %p231
      $region30: #{tpu_custom_call.1} parent=5 // pred_check_branch
        %234 = sbr.rel (%p232) target = $region32
      $region31: #{tpu_custom_call.1} parent=5 // pred_region
        // Predicated region
        $region33: #{tpu_custom_call.1} parent=31 // pred_check
          %p235 = pneg %p36
        $region34: #{tpu_custom_call.1} parent=31 // pred_check_branch
          %237 = sbr.rel (%p235) target = $region36
        $region35: #{tpu_custom_call.1} parent=31 // pred_region
          %s238 = smul.u32 16, %s16
          %p239 = scmp.lt.s32.totalorder %s238, 31
          %s240 = scalar_select %p239, %s238, 31
          %s241 = smul.addr %s240, 8
          %s242 = scalar_lea.vmem %s0, %s241
          %s243 = smul.u32 16, %s16
        $region36: #{tpu_custom_call.1} parent=31 // pred_fallthru
          _
        // Predicated region
        $region37: #{tpu_custom_call.1} parent=31 // pred_check
          %p244 = pneg %p62
        $region38: #{tpu_custom_call.1} parent=31 // pred_check_branch
          %246 = sbr.rel (%p244) target = $region40
        $region39: #{tpu_custom_call.1} parent=31 // pred_region
          %s247 = smul.u32 16, %s16
          %p248 = scmp.lt.s32.totalorder %s247, 31
          %s249 = scalar_select %p248, %s247, 31
          %s250 = smul.addr %s249, 8
          %s251 = scalar_lea.vmem %s1, %s250
          %s252 = smul.u32 16, %s16
        $region40: #{tpu_custom_call.1} parent=31 // pred_fallthru
          _
        // Predicated region
        $region41: #{tpu_custom_call.1} parent=31 // pred_check
          %p253 = pneg %p88
        $region42: #{tpu_custom_call.1} parent=31 // pred_check_branch
          %255 = sbr.rel (%p253) target = $region44
        $region43: #{tpu_custom_call.1} parent=31 // pred_region
          %p256 = scmp.lt.s32.totalorder %s16, 1
          %s257 = scalar_select %p256, %s16, 1
          %s258 = smul.addr %s257, 8
          %s259 = scalar_lea.vmem %s2, %s258
        $region44: #{tpu_custom_call.1} parent=31 // pred_fallthru
          _
      $region32: #{tpu_custom_call.1} parent=5 // pred_fallthru
        _
      %p260 = scmp.le.s32.totalorder 1, %s16
      %p261 = scmp.lt.s32.totalorder %s16, 3
      %p262 = pnand %p260, %p261
      %p263 = pneg %p262
      // Predicated region
      $region45: #{tpu_custom_call.1} parent=5 // pred_check
        _
      $region46: #{tpu_custom_call.1} parent=5 // pred_check_branch
        %265 = sbr.rel (%p262) target = $region48
      $region47: #{tpu_custom_call.1} parent=5 // pred_region
        %s266 = ssub.s32 %s16, 1
        %s267 = smul.u32 16, %s21
        %p268 = scmp.lt.s32.totalorder %s267, 31
        %s269 = scalar_select %p268, %s267, 31
        %s270 = smul.addr %s269, 8
        %s271 = scalar_lea.vmem %s0, %s270
        %p272 = pneg %p42
        %p273 = pneg %p39
        %s274 = smul.u32 16, %s21
        %p275 = scmp.lt.s32.totalorder %s274, 31
        %s276 = scalar_select %p275, %s274, 31
        %s277 = smul.addr %s276, 8
        %s278 = scalar_lea.vmem %s1, %s277
        %p279 = pneg %p68
        %p280 = pneg %p65
        %p281 = scmp.lt.s32.totalorder %s21, 1
        %s282 = scalar_select %p281, %s21, 1
        %s283 = smul.addr %s282, 8
        %s284 = scalar_lea.vmem %s2, %s283
        %p285 = pneg %p94
        %p286 = pneg %p91
        %p287 = pneg %p115
        %p288 = pneg %p112
        %p289 = pneg %p136
        %p290 = pneg %p133
        %p291 = pneg %p157
        %p292 = pneg %p154
        %p293 = pneg %p178
        %p294 = pneg %p175
        %p295 = pneg %p204
        %p296 = pneg %p201
        %s297 = sand.u32 %s191, 1
        %s298 = scalar_lea.sflag [#allocation3], %s297
        %s299 = sand.u32 %s191, 1
        %s300 = smul.addr %s299, 8
        %s301 = scalar_lea.vmem [#allocation2], %s300
        %s302 = smul.u32 16, %s21
        %p303 = scmp.lt.s32.totalorder %s302, 31
        %s304 = scalar_select %p303, %s302, 31
        %s305 = smul.addr %s304, 8
        %s306 = scalar_lea.vmem %s0, %s305
        %s307 = smul.u32 16, %s21
        %s308 = smul.u32 16, %s21
        %p309 = scmp.lt.s32.totalorder %s308, 31
        %s310 = scalar_select %p309, %s308, 31
        %s311 = smul.addr %s310, 8
        %s312 = scalar_lea.vmem %s1, %s311
        %s313 = smul.u32 16, %s21
        %p314 = scmp.lt.s32.totalorder %s21, 1
        %s315 = scalar_select %p314, %s21, 1
        %s316 = smul.addr %s315, 8
        %s317 = scalar_lea.vmem %s2, %s316
        %v319 = vld [vmem:[%s306] sm:$0xff]
        %v320 = vld [vmem:[%s306 + $0x8] sm:$0xff]
        %v321 = vld [vmem:[%s306 + $0x10] sm:$0xff]
        %v322 = vld [vmem:[%s306 + $0x18] sm:$0xff]
        %v323 = vld [vmem:[%s306 + $0x20] sm:$0xff]
        %v324 = vld [vmem:[%s306 + $0x28] sm:$0xff]
        %v325 = vld [vmem:[%s306 + $0x30] sm:$0xff]
        %v326 = vld [vmem:[%s306 + $0x38] sm:$0xff]
        %v327 = vld [vmem:[%s306 + $0x40] sm:$0xff]
        %v328 = vld [vmem:[%s306 + $0x48] sm:$0xff]
        %v329 = vld [vmem:[%s306 + $0x50] sm:$0xff]
        %v330 = vld [vmem:[%s306 + $0x58] sm:$0xff]
        %v331 = vld [vmem:[%s306 + $0x60] sm:$0xff]
        %v332 = vld [vmem:[%s306 + $0x68] sm:$0xff]
        %v333 = vld [vmem:[%s306 + $0x70] sm:$0xff]
        %v334 = vld [vmem:[%s306 + $0x78] sm:$0xff]
        %v335 = vld [vmem:[%s312] sm:$0xff]
        %v336 = vld [vmem:[%s312 + $0x8] sm:$0xff]
        %v337 = vld [vmem:[%s312 + $0x10] sm:$0xff]
        %v338 = vld [vmem:[%s312 + $0x18] sm:$0xff]
        %v339 = vld [vmem:[%s312 + $0x20] sm:$0xff]
        %v340 = vld [vmem:[%s312 + $0x28] sm:$0xff]
        %v341 = vld [vmem:[%s312 + $0x30] sm:$0xff]
        %v342 = vld [vmem:[%s312 + $0x38] sm:$0xff]
        %v343 = vld [vmem:[%s312 + $0x40] sm:$0xff]
        %v344 = vld [vmem:[%s312 + $0x48] sm:$0xff]
        %v345 = vld [vmem:[%s312 + $0x50] sm:$0xff]
        %v346 = vld [vmem:[%s312 + $0x58] sm:$0xff]
        %v347 = vld [vmem:[%s312 + $0x60] sm:$0xff]
        %v348 = vld [vmem:[%s312 + $0x68] sm:$0xff]
        %v349 = vld [vmem:[%s312 + $0x70] sm:$0xff]
        %v350 = vld [vmem:[%s312 + $0x78] sm:$0xff]
        %v351 = vld [vmem:[%s3] sm:$0xf]
        %v352 = vld [vmem:[%s3 + $0x4] sm:$0xf]
        %v353 = vld [vmem:[%s3 + $0x8] sm:$0xf]
        %v354 = vld [vmem:[%s3 + $0xc] sm:$0xf]
        %v355 = vld [vmem:[%s3 + $0x10] sm:$0xf]
        %v356 = vld [vmem:[%s3 + $0x14] sm:$0xf]
        %v357 = vld [vmem:[%s3 + $0x18] sm:$0xf]
        %v358 = vld [vmem:[%s3 + $0x1c] sm:$0xf]
        %v359 = vld [vmem:[%s3 + $0x20] sm:$0xf]
        %v360 = vld [vmem:[%s3 + $0x24] sm:$0xf]
        %v361 = vld [vmem:[%s3 + $0x28] sm:$0xf]
        %v362 = vld [vmem:[%s3 + $0x2c] sm:$0xf]
        %v363 = vld [vmem:[%s3 + $0x30] sm:$0xf]
        %v364 = vld [vmem:[%s3 + $0x34] sm:$0xf]
        %v365 = vld [vmem:[%s3 + $0x38] sm:$0xf]
        %v366 = vld [vmem:[%s3 + $0x3c] sm:$0xf]
        %v367 = vld [vmem:[%s3 + $0x40] sm:$0xf]
        %v368 = vld [vmem:[%s3 + $0x44] sm:$0xf]
        %v369 = vld [vmem:[%s3 + $0x48] sm:$0xf]
        %v370 = vld [vmem:[%s3 + $0x4c] sm:$0xf]
        %v371 = vld [vmem:[%s3 + $0x50] sm:$0xf]
        %v372 = vld [vmem:[%s3 + $0x54] sm:$0xf]
        %v373 = vld [vmem:[%s3 + $0x58] sm:$0xf]
        %v374 = vld [vmem:[%s3 + $0x5c] sm:$0xf]
        %v375 = vld [vmem:[%s3 + $0x60] sm:$0xf]
        %v376 = vld [vmem:[%s3 + $0x64] sm:$0xf]
        %v377 = vld [vmem:[%s3 + $0x68] sm:$0xf]
        %v378 = vld [vmem:[%s3 + $0x6c] sm:$0xf]
        %v379 = vld [vmem:[%s3 + $0x70] sm:$0xf]
        %v380 = vld [vmem:[%s3 + $0x74] sm:$0xf]
        %v381 = vld [vmem:[%s3 + $0x78] sm:$0xf]
        %v382 = vld [vmem:[%s3 + $0x7c] sm:$0xf]
        %v383 = vlaneseq
        %v384 = vand.u32 %v383, 127
        %v385 = vadd.s32 %v384, 128
        %386 = vset.pattern.permute.xlu0 0
        %387 = vperm.xlu0 %386, %v319
        %v388 = vpop.permute.xlu0 %387
        %389 = vset.pattern.permute.xlu0 0
        %390 = vperm.xlu0 %389, %v320
        %v391 = vpop.permute.xlu0 %390
        %392 = vset.pattern.permute.xlu0 0
        %393 = vperm.xlu0 %392, %v321
        %v394 = vpop.permute.xlu0 %393
        %395 = vset.pattern.permute.xlu0 0
        %396 = vperm.xlu0 %395, %v322
        %v397 = vpop.permute.xlu0 %396
        %398 = vset.pattern.permute.xlu0 0
        %399 = vperm.xlu0 %398, %v323
        %v400 = vpop.permute.xlu0 %399
        %401 = vset.pattern.permute.xlu0 0
        %402 = vperm.xlu0 %401, %v324
        %v403 = vpop.permute.xlu0 %402
        %404 = vset.pattern.permute.xlu0 0
        %405 = vperm.xlu0 %404, %v325
        %v406 = vpop.permute.xlu0 %405
        %407 = vset.pattern.permute.xlu0 0
        %408 = vperm.xlu0 %407, %v326
        %v409 = vpop.permute.xlu0 %408
        %410 = vset.pattern.permute.xlu0 0
        %411 = vperm.xlu0 %410, %v327
        %v412 = vpop.permute.xlu0 %411
        %413 = vset.pattern.permute.xlu0 0
        %414 = vperm.xlu0 %413, %v328
        %v415 = vpop.permute.xlu0 %414
        %416 = vset.pattern.permute.xlu0 0
        %417 = vperm.xlu0 %416, %v329
        %v418 = vpop.permute.xlu0 %417
        %419 = vset.pattern.permute.xlu0 0
        %420 = vperm.xlu0 %419, %v330
        %v421 = vpop.permute.xlu0 %420
        %422 = vset.pattern.permute.xlu0 0
        %423 = vperm.xlu0 %422, %v331
        %v424 = vpop.permute.xlu0 %423
        %425 = vset.pattern.permute.xlu0 0
        %426 = vperm.xlu0 %425, %v332
        %v427 = vpop.permute.xlu0 %426
        %428 = vset.pattern.permute.xlu0 0
        %429 = vperm.xlu0 %428, %v333
        %v430 = vpop.permute.xlu0 %429
        %431 = vset.pattern.permute.xlu0 0
        %432 = vperm.xlu0 %431, %v334
        %v433 = vpop.permute.xlu0 %432
        %vm434 = vcmp.eq.s32.totalorder %v384, %v388
        %vm435 = vcmp.eq.s32.totalorder %v385, %v388
        %vm436 = vcmp.eq.s32.totalorder %v384, %v391
        %vm437 = vcmp.eq.s32.totalorder %v385, %v391
        %vm438 = vcmp.eq.s32.totalorder %v384, %v394
        %vm439 = vcmp.eq.s32.totalorder %v385, %v394
        %vm440 = vcmp.eq.s32.totalorder %v384, %v397
        %vm441 = vcmp.eq.s32.totalorder %v385, %v397
        %vm442 = vcmp.eq.s32.totalorder %v384, %v400
        %vm443 = vcmp.eq.s32.totalorder %v385, %v400
        %vm444 = vcmp.eq.s32.totalorder %v384, %v403
        %vm445 = vcmp.eq.s32.totalorder %v385, %v403
        %vm446 = vcmp.eq.s32.totalorder %v384, %v406
        %vm447 = vcmp.eq.s32.totalorder %v385, %v406
        %vm448 = vcmp.eq.s32.totalorder %v384, %v409
        %vm449 = vcmp.eq.s32.totalorder %v385, %v409
        %vm450 = vcmp.eq.s32.totalorder %v384, %v412
        %vm451 = vcmp.eq.s32.totalorder %v385, %v412
        %vm452 = vcmp.eq.s32.totalorder %v384, %v415
        %vm453 = vcmp.eq.s32.totalorder %v385, %v415
        %vm454 = vcmp.eq.s32.totalorder %v384, %v418
        %vm455 = vcmp.eq.s32.totalorder %v385, %v418
        %vm456 = vcmp.eq.s32.totalorder %v384, %v421
        %vm457 = vcmp.eq.s32.totalorder %v385, %v421
        %vm458 = vcmp.eq.s32.totalorder %v384, %v424
        %vm459 = vcmp.eq.s32.totalorder %v385, %v424
        %vm460 = vcmp.eq.s32.totalorder %v384, %v427
        %vm461 = vcmp.eq.s32.totalorder %v385, %v427
        %vm462 = vcmp.eq.s32.totalorder %v384, %v430
        %vm463 = vcmp.eq.s32.totalorder %v385, %v430
        %vm464 = vcmp.eq.s32.totalorder %v384, %v433
        %vm465 = vcmp.eq.s32.totalorder %v385, %v433
        %466 = vset.pattern.permute.xlu0 0
        %467 = vperm.xlu0 %466, %v335
        %v468 = vpop.permute.xlu0 %467
        %469 = vset.pattern.permute.xlu0 0
        %470 = vperm.xlu0 %469, %v336
        %v471 = vpop.permute.xlu0 %470
        %472 = vset.pattern.permute.xlu0 0
        %473 = vperm.xlu0 %472, %v337
        %v474 = vpop.permute.xlu0 %473
        %475 = vset.pattern.permute.xlu0 0
        %476 = vperm.xlu0 %475, %v338
        %v477 = vpop.permute.xlu0 %476
        %478 = vset.pattern.permute.xlu0 0
        %479 = vperm.xlu0 %478, %v339
        %v480 = vpop.permute.xlu0 %479
        %481 = vset.pattern.permute.xlu0 0
        %482 = vperm.xlu0 %481, %v340
        %v483 = vpop.permute.xlu0 %482
        %484 = vset.pattern.permute.xlu0 0
        %485 = vperm.xlu0 %484, %v341
        %v486 = vpop.permute.xlu0 %485
        %487 = vset.pattern.permute.xlu0 0
        %488 = vperm.xlu0 %487, %v342
        %v489 = vpop.permute.xlu0 %488
        %490 = vset.pattern.permute.xlu0 0
        %491 = vperm.xlu0 %490, %v343
        %v492 = vpop.permute.xlu0 %491
        %493 = vset.pattern.permute.xlu0 0
        %494 = vperm.xlu0 %493, %v344
        %v495 = vpop.permute.xlu0 %494
        %496 = vset.pattern.permute.xlu0 0
        %497 = vperm.xlu0 %496, %v345
        %v498 = vpop.permute.xlu0 %497
        %499 = vset.pattern.permute.xlu0 0
        %500 = vperm.xlu0 %499, %v346
        %v501 = vpop.permute.xlu0 %500
        %502 = vset.pattern.permute.xlu0 0
        %503 = vperm.xlu0 %502, %v347
        %v504 = vpop.permute.xlu0 %503
        %505 = vset.pattern.permute.xlu0 0
        %506 = vperm.xlu0 %505, %v348
        %v507 = vpop.permute.xlu0 %506
        %508 = vset.pattern.permute.xlu0 0
        %509 = vperm.xlu0 %508, %v349
        %v510 = vpop.permute.xlu0 %509
        %511 = vset.pattern.permute.xlu0 0
        %512 = vperm.xlu0 %511, %v350
        %v513 = vpop.permute.xlu0 %512
        %vm514 = vcmp.eq.s32.totalorder %v384, %v468
        %vm515 = vcmp.eq.s32.totalorder %v385, %v468
        %vm516 = vcmp.eq.s32.totalorder %v384, %v471
        %vm517 = vcmp.eq.s32.totalorder %v385, %v471
        %vm518 = vcmp.eq.s32.totalorder %v384, %v474
        %vm519 = vcmp.eq.s32.totalorder %v385, %v474
        %vm520 = vcmp.eq.s32.totalorder %v384, %v477
        %vm521 = vcmp.eq.s32.totalorder %v385, %v477
        %vm522 = vcmp.eq.s32.totalorder %v384, %v480
        %vm523 = vcmp.eq.s32.totalorder %v385, %v480
        %vm524 = vcmp.eq.s32.totalorder %v384, %v483
        %vm525 = vcmp.eq.s32.totalorder %v385, %v483
        %vm526 = vcmp.eq.s32.totalorder %v384, %v486
        %vm527 = vcmp.eq.s32.totalorder %v385, %v486
        %vm528 = vcmp.eq.s32.totalorder %v384, %v489
        %vm529 = vcmp.eq.s32.totalorder %v385, %v489
        %vm530 = vcmp.eq.s32.totalorder %v384, %v492
        %vm531 = vcmp.eq.s32.totalorder %v385, %v492
        %vm532 = vcmp.eq.s32.totalorder %v384, %v495
        %vm533 = vcmp.eq.s32.totalorder %v385, %v495
        %vm534 = vcmp.eq.s32.totalorder %v384, %v498
        %vm535 = vcmp.eq.s32.totalorder %v385, %v498
        %vm536 = vcmp.eq.s32.totalorder %v384, %v501
        %vm537 = vcmp.eq.s32.totalorder %v385, %v501
        %vm538 = vcmp.eq.s32.totalorder %v384, %v504
        %vm539 = vcmp.eq.s32.totalorder %v385, %v504
        %vm540 = vcmp.eq.s32.totalorder %v384, %v507
        %vm541 = vcmp.eq.s32.totalorder %v385, %v507
        %vm542 = vcmp.eq.s32.totalorder %v384, %v510
        %vm543 = vcmp.eq.s32.totalorder %v385, %v510
        %vm544 = vcmp.eq.s32.totalorder %v384, %v513
        %vm545 = vcmp.eq.s32.totalorder %v385, %v513
        %vm546 = vmor %vm434, %vm514
        %vm547 = vmor %vm435, %vm515
        %vm548 = vmor %vm436, %vm516
        %vm549 = vmor %vm437, %vm517
        %vm550 = vmor %vm438, %vm518
        %vm551 = vmor %vm439, %vm519
        %vm552 = vmor %vm440, %vm520
        %vm553 = vmor %vm441, %vm521
        %vm554 = vmor %vm442, %vm522
        %vm555 = vmor %vm443, %vm523
        %vm556 = vmor %vm444, %vm524
        %vm557 = vmor %vm445, %vm525
        %vm558 = vmor %vm446, %vm526
        %vm559 = vmor %vm447, %vm527
        %vm560 = vmor %vm448, %vm528
        %vm561 = vmor %vm449, %vm529
        %vm562 = vmor %vm450, %vm530
        %vm563 = vmor %vm451, %vm531
        %vm564 = vmor %vm452, %vm532
        %vm565 = vmor %vm453, %vm533
        %vm566 = vmor %vm454, %vm534
        %vm567 = vmor %vm455, %vm535
        %vm568 = vmor %vm456, %vm536
        %vm569 = vmor %vm457, %vm537
        %vm570 = vmor %vm458, %vm538
        %vm571 = vmor %vm459, %vm539
        %vm572 = vmor %vm460, %vm540
        %vm573 = vmor %vm461, %vm541
        %vm574 = vmor %vm462, %vm542
        %vm575 = vmor %vm463, %vm543
        %vm576 = vmor %vm464, %vm544
        %vm577 = vmor %vm465, %vm545
        %v578 = vsel %vm546, 1, 0
        %v579 = vsel %vm547, 1, 0
        %v580 = vsel %vm548, 1, 0
        %v581 = vsel %vm549, 1, 0
        %v582 = vsel %vm550, 1, 0
        %v583 = vsel %vm551, 1, 0
        %v584 = vsel %vm552, 1, 0
        %v585 = vsel %vm553, 1, 0
        %v586 = vsel %vm554, 1, 0
        %v587 = vsel %vm555, 1, 0
        %v588 = vsel %vm556, 1, 0
        %v589 = vsel %vm557, 1, 0
        %v590 = vsel %vm558, 1, 0
        %v591 = vsel %vm559, 1, 0
        %v592 = vsel %vm560, 1, 0
        %v593 = vsel %vm561, 1, 0
        %v594 = vsel %vm562, 1, 0
        %v595 = vsel %vm563, 1, 0
        %v596 = vsel %vm564, 1, 0
        %v597 = vsel %vm565, 1, 0
        %v598 = vsel %vm566, 1, 0
        %v599 = vsel %vm567, 1, 0
        %v600 = vsel %vm568, 1, 0
        %v601 = vsel %vm569, 1, 0
        %v602 = vsel %vm570, 1, 0
        %v603 = vsel %vm571, 1, 0
        %v604 = vsel %vm572, 1, 0
        %v605 = vsel %vm573, 1, 0
        %v606 = vsel %vm574, 1, 0
        %v607 = vsel %vm575, 1, 0
        %v608 = vsel %vm576, 1, 0
        %v609 = vsel %vm577, 1, 0
        %v610 = vcvt.s32.f32 %v578
        %v611 = vcvt.s32.f32 %v579
        %v612 = vcvt.s32.f32 %v580
        %v613 = vcvt.s32.f32 %v581
        %v614 = vcvt.s32.f32 %v582
        %v615 = vcvt.s32.f32 %v583
        %v616 = vcvt.s32.f32 %v584
        %v617 = vcvt.s32.f32 %v585
        %v618 = vcvt.s32.f32 %v586
        %v619 = vcvt.s32.f32 %v587
        %v620 = vcvt.s32.f32 %v588
        %v621 = vcvt.s32.f32 %v589
        %v622 = vcvt.s32.f32 %v590
        %v623 = vcvt.s32.f32 %v591
        %v624 = vcvt.s32.f32 %v592
        %v625 = vcvt.s32.f32 %v593
        %v626 = vcvt.s32.f32 %v594
        %v627 = vcvt.s32.f32 %v595
        %v628 = vcvt.s32.f32 %v596
        %v629 = vcvt.s32.f32 %v597
        %v630 = vcvt.s32.f32 %v598
        %v631 = vcvt.s32.f32 %v599
        %v632 = vcvt.s32.f32 %v600
        %v633 = vcvt.s32.f32 %v601
        %v634 = vcvt.s32.f32 %v602
        %v635 = vcvt.s32.f32 %v603
        %v636 = vcvt.s32.f32 %v604
        %v637 = vcvt.s32.f32 %v605
        %v638 = vcvt.s32.f32 %v606
        %v639 = vcvt.s32.f32 %v607
        %v640 = vcvt.s32.f32 %v608
        %v641 = vcvt.s32.f32 %v609
        %v642 = vpack.c.bf16 %v612, %v610
        %v643 = vpack.c.bf16 %v613, %v611
        %v644 = vpack.c.bf16 %v616, %v614
        %v645 = vpack.c.bf16 %v617, %v615
        %v646 = vpack.c.bf16 %v620, %v618
        %v647 = vpack.c.bf16 %v621, %v619
        %v648 = vpack.c.bf16 %v624, %v622
        %v649 = vpack.c.bf16 %v625, %v623
        %v650 = vpack.c.bf16 %v628, %v626
        %v651 = vpack.c.bf16 %v629, %v627
        %v652 = vpack.c.bf16 %v632, %v630
        %v653 = vpack.c.bf16 %v633, %v631
        %v654 = vpack.c.bf16 %v636, %v634
        %v655 = vpack.c.bf16 %v637, %v635
        %v656 = vpack.c.bf16 %v640, %v638
        %v657 = vpack.c.bf16 %v641, %v639
        %v658 = vld [vmem:[%s4] sm:$0x1]
        %v660 = vlaneseq
        %v661 = vshrl.u32 %v660, 7
        %v662 = vsub.s32 0, %v661
        %v663 = vrot.slane %v658, %v662
        %v697 = vunpack.c.l.b16 %v351
        %v698 = vunpack.c.l.b16 %v352
        %v699 = vunpack.c.l.b16 %v353
        %v700 = vunpack.c.l.b16 %v354
        %v701 = vunpack.c.l.b16 %v355
        %v702 = vunpack.c.l.b16 %v356
        %v703 = vunpack.c.l.b16 %v357
        %v704 = vunpack.c.l.b16 %v358
        %v705 = vunpack.c.l.b16 %v359
        %v706 = vunpack.c.l.b16 %v360
        %v707 = vunpack.c.l.b16 %v361
        %v708 = vunpack.c.l.b16 %v362
        %v709 = vunpack.c.l.b16 %v363
        %v710 = vunpack.c.l.b16 %v364
        %v711 = vunpack.c.l.b16 %v365
        %v712 = vunpack.c.l.b16 %v366
        %v713 = vunpack.c.l.b16 %v367
        %v714 = vunpack.c.l.b16 %v368
        %v715 = vunpack.c.l.b16 %v369
        %v716 = vunpack.c.l.b16 %v370
        %v717 = vunpack.c.l.b16 %v371
        %v718 = vunpack.c.l.b16 %v372
        %v719 = vunpack.c.l.b16 %v373
        %v720 = vunpack.c.l.b16 %v374
        %v721 = vunpack.c.l.b16 %v375
        %v722 = vunpack.c.l.b16 %v376
        %v723 = vunpack.c.l.b16 %v377
        %v724 = vunpack.c.l.b16 %v378
        %v725 = vunpack.c.l.b16 %v379
        %v726 = vunpack.c.l.b16 %v380
        %v727 = vunpack.c.l.b16 %v381
        %v728 = vunpack.c.l.b16 %v382
        %v729 = vpack.c.b16 %v698, %v697
        %v730 = vpack.c.b16 %v700, %v699
        %v731 = vpack.c.b16 %v702, %v701
        %v732 = vpack.c.b16 %v704, %v703
        %v733 = vpack.c.b16 %v706, %v705
        %v734 = vpack.c.b16 %v708, %v707
        %v735 = vpack.c.b16 %v710, %v709
        %v736 = vpack.c.b16 %v712, %v711
        %v737 = vpack.c.b16 %v714, %v713
        %v738 = vpack.c.b16 %v716, %v715
        %v739 = vpack.c.b16 %v718, %v717
        %v740 = vpack.c.b16 %v720, %v719
        %v741 = vpack.c.b16 %v722, %v721
        %v742 = vpack.c.b16 %v724, %v723
        %v743 = vpack.c.b16 %v726, %v725
        %v744 = vpack.c.b16 %v728, %v727
        %761 = vmatprep.subr.bf16.mxu0 0
        %762 = vmatpush1.bf16.msra.mxu0 %v729
        %763 = vmatprep.subr.bf16.mxu0 0
        %764 = vmatpush1.bf16.msra.mxu0 %v730
        %765 = vmatprep.subr.bf16.mxu0 0
        %766 = vmatpush1.bf16.msra.mxu0 %v731
        %767 = vmatprep.subr.bf16.mxu0 0
        %768 = vmatpush1.bf16.msra.mxu0 %v732
        %769 = vmatprep.subr.bf16.mxu0 0
        %770 = vmatpush1.bf16.msra.mxu0 %v733
        %771 = vmatprep.subr.bf16.mxu0 0
        %772 = vmatpush1.bf16.msra.mxu0 %v734
        %773 = vmatprep.subr.bf16.mxu0 0
        %774 = vmatpush1.bf16.msra.mxu0 %v735
        %775 = vmatprep.subr.bf16.mxu0 0
        %776 = vmatpush1.bf16.msra.mxu0 %v736
        %777 = vmatprep.subr.bf16.mxu0 0
        %778 = vmatpush1.bf16.msra.mxu0 %v737
        %779 = vmatprep.subr.bf16.mxu0 0
        %780 = vmatpush1.bf16.msra.mxu0 %v738
        %781 = vmatprep.subr.bf16.mxu0 0
        %782 = vmatpush1.bf16.msra.mxu0 %v739
        %783 = vmatprep.subr.bf16.mxu0 0
        %784 = vmatpush1.bf16.msra.mxu0 %v740
        %785 = vmatprep.subr.bf16.mxu0 0
        %786 = vmatpush1.bf16.msra.mxu0 %v741
        %787 = vmatprep.subr.bf16.mxu0 0
        %788 = vmatpush1.bf16.msra.mxu0 %v742
        %789 = vmatprep.subr.bf16.mxu0 0
        %790 = vmatpush1.bf16.msra.mxu0 %v743
        %791 = vmatprep.subr.bf16.mxu0 0
        %792 = vmatpush1.bf16.msra.mxu0 %v744
        %793 = vmatprep.mubr.bf16.mxu0 %v643
        %794 = vmatmul.mubr.bf16.gmra.mrb[0].mxu0 %v642
        %v795 = vpop.f32.mrb[0].mxu0
        %v796 = vadd.f32 %v663, %v795
        %v797 = vpop.f32.mrb[0].mxu0
        %v798 = vpop.f32.mrb[0].mxu0
        %v799 = vadd.f32 %v663, %v798
        %v800 = vpop.f32.mrb[0].mxu0
        %801 = vmatprep.mubr.bf16.mxu0 %v645
        %802 = vmatmul.mubr.bf16.gmra.mrb[0].mxu0 %v644
        %v803 = vpop.f32.mrb[0].mxu0
        %v804 = vadd.f32 %v663, %v803
        %v805 = vpop.f32.mrb[0].mxu0
        %v806 = vpop.f32.mrb[0].mxu0
        %v807 = vadd.f32 %v663, %v806
        %v808 = vpop.f32.mrb[0].mxu0
        %809 = vmatprep.mubr.bf16.mxu0 %v647
        %810 = vmatmul.mubr.bf16.gmra.mrb[0].mxu0 %v646
        %v811 = vpop.f32.mrb[0].mxu0
        %v812 = vadd.f32 %v663, %v811
        %v813 = vpop.f32.mrb[0].mxu0
        %v814 = vpop.f32.mrb[0].mxu0
        %v815 = vadd.f32 %v663, %v814
        %v816 = vpop.f32.mrb[0].mxu0
        %817 = vmatprep.mubr.bf16.mxu0 %v649
        %818 = vmatmul.mubr.bf16.gmra.mrb[0].mxu0 %v648
        %v819 = vpop.f32.mrb[0].mxu0
        %v820 = vadd.f32 %v663, %v819
        %v821 = vpop.f32.mrb[0].mxu0
        %v822 = vpop.f32.mrb[0].mxu0
        %v823 = vadd.f32 %v663, %v822
        %v824 = vpop.f32.mrb[0].mxu0
        %825 = vmatprep.mubr.bf16.mxu0 %v651
        %826 = vmatmul.mubr.bf16.gmra.mrb[0].mxu0 %v650
        %v827 = vpop.f32.mrb[0].mxu0
        %v828 = vadd.f32 %v663, %v827
        %v829 = vpop.f32.mrb[0].mxu0
        %v830 = vpop.f32.mrb[0].mxu0
        %v831 = vadd.f32 %v663, %v830
        %v832 = vpop.f32.mrb[0].mxu0
        %833 = vmatprep.mubr.bf16.mxu0 %v653
        %834 = vmatmul.mubr.bf16.gmra.mrb[0].mxu0 %v652
        %v835 = vpop.f32.mrb[0].mxu0
        %v836 = vadd.f32 %v663, %v835
        %v837 = vpop.f32.mrb[0].mxu0
        %v838 = vpop.f32.mrb[0].mxu0
        %v839 = vadd.f32 %v663, %v838
        %v840 = vpop.f32.mrb[0].mxu0
        %841 = vmatprep.mubr.bf16.mxu0 %v655
        %842 = vmatmul.mubr.bf16.gmra.mrb[0].mxu0 %v654
        %v843 = vpop.f32.mrb[0].mxu0
        %v844 = vadd.f32 %v663, %v843
        %v845 = vpop.f32.mrb[0].mxu0
        %v846 = vpop.f32.mrb[0].mxu0
        %v847 = vadd.f32 %v663, %v846
        %v848 = vpop.f32.mrb[0].mxu0
        %849 = vmatprep.mubr.bf16.mxu0 %v657
        %850 = vmatmul.mubr.bf16.gmra.mrb[0].mxu0 %v656
        %v851 = vpop.f32.mrb[0].mxu0
        %v852 = vadd.f32 %v663, %v851
        %v853 = vpop.f32.mrb[0].mxu0
        %v854 = vpop.f32.mrb[0].mxu0
        %v855 = vadd.f32 %v663, %v854
        %v856 = vpop.f32.mrb[0].mxu0
        %857 = vdwg.mxu0
        %858 = vadd.xlane.f32.xlu0 %v796
        %v859 = vpop.xlane.xlu0 %858
        %860 = vadd.xlane.f32.xlu0 %v799
        %v861 = vpop.xlane.xlu0 %860
        %862 = vadd.xlane.f32.xlu0 %v804
        %v863 = vpop.xlane.xlu0 %862
        %864 = vadd.xlane.f32.xlu0 %v807
        %v865 = vpop.xlane.xlu0 %864
        %866 = vadd.xlane.f32.xlu0 %v812
        %v867 = vpop.xlane.xlu0 %866
        %868 = vadd.xlane.f32.xlu0 %v815
        %v869 = vpop.xlane.xlu0 %868
        %870 = vadd.xlane.f32.xlu0 %v820
        %v871 = vpop.xlane.xlu0 %870
        %872 = vadd.xlane.f32.xlu0 %v823
        %v873 = vpop.xlane.xlu0 %872
        %874 = vadd.xlane.f32.xlu0 %v828
        %v875 = vpop.xlane.xlu0 %874
        %876 = vadd.xlane.f32.xlu0 %v831
        %v877 = vpop.xlane.xlu0 %876
        %878 = vadd.xlane.f32.xlu0 %v836
        %v879 = vpop.xlane.xlu0 %878
        %880 = vadd.xlane.f32.xlu0 %v839
        %v881 = vpop.xlane.xlu0 %880
        %882 = vadd.xlane.f32.xlu0 %v844
        %v883 = vpop.xlane.xlu0 %882
        %884 = vadd.xlane.f32.xlu0 %v847
        %v885 = vpop.xlane.xlu0 %884
        %886 = vadd.xlane.f32.xlu0 %v852
        %v887 = vpop.xlane.xlu0 %886
        %888 = vadd.xlane.f32.xlu0 %v855
        %v889 = vpop.xlane.xlu0 %888
        %v890 = vmul.f32 %v859, 0.03125
        %v891 = vmul.f32 %v861, 0.03125
        %v892 = vmul.f32 %v863, 0.03125
        %v893 = vmul.f32 %v865, 0.03125
        %v894 = vmul.f32 %v867, 0.03125
        %v895 = vmul.f32 %v869, 0.03125
        %v896 = vmul.f32 %v871, 0.03125
        %v897 = vmul.f32 %v873, 0.03125
        %v898 = vmul.f32 %v875, 0.03125
        %v899 = vmul.f32 %v877, 0.03125
        %v900 = vmul.f32 %v879, 0.03125
        %v901 = vmul.f32 %v881, 0.03125
        %v902 = vmul.f32 %v883, 0.03125
        %v903 = vmul.f32 %v885, 0.03125
        %v904 = vmul.f32 %v887, 0.03125
        %v905 = vmul.f32 %v889, 0.03125
        %v906 = vmul.f32 %v796, %v796
        %v907 = vmul.f32 %v799, %v799
        %v908 = vmul.f32 %v804, %v804
        %v909 = vmul.f32 %v807, %v807
        %v910 = vmul.f32 %v812, %v812
        %v911 = vmul.f32 %v815, %v815
        %v912 = vmul.f32 %v820, %v820
        %v913 = vmul.f32 %v823, %v823
        %v914 = vmul.f32 %v828, %v828
        %v915 = vmul.f32 %v831, %v831
        %v916 = vmul.f32 %v836, %v836
        %v917 = vmul.f32 %v839, %v839
        %v918 = vmul.f32 %v844, %v844
        %v919 = vmul.f32 %v847, %v847
        %v920 = vmul.f32 %v852, %v852
        %v921 = vmul.f32 %v855, %v855
        %922 = vadd.xlane.f32.xlu0 %v906
        %v923 = vpop.xlane.xlu0 %922
        %924 = vadd.xlane.f32.xlu0 %v907
        %v925 = vpop.xlane.xlu0 %924
        %926 = vadd.xlane.f32.xlu0 %v908
        %v927 = vpop.xlane.xlu0 %926
        %928 = vadd.xlane.f32.xlu0 %v909
        %v929 = vpop.xlane.xlu0 %928
        %930 = vadd.xlane.f32.xlu0 %v910
        %v931 = vpop.xlane.xlu0 %930
        %932 = vadd.xlane.f32.xlu0 %v911
        %v933 = vpop.xlane.xlu0 %932
        %934 = vadd.xlane.f32.xlu0 %v912
        %v935 = vpop.xlane.xlu0 %934
        %936 = vadd.xlane.f32.xlu0 %v913
        %v937 = vpop.xlane.xlu0 %936
        %938 = vadd.xlane.f32.xlu0 %v914
        %v939 = vpop.xlane.xlu0 %938
        %940 = vadd.xlane.f32.xlu0 %v915
        %v941 = vpop.xlane.xlu0 %940
        %942 = vadd.xlane.f32.xlu0 %v916
        %v943 = vpop.xlane.xlu0 %942
        %944 = vadd.xlane.f32.xlu0 %v917
        %v945 = vpop.xlane.xlu0 %944
        %946 = vadd.xlane.f32.xlu0 %v918
        %v947 = vpop.xlane.xlu0 %946
        %948 = vadd.xlane.f32.xlu0 %v919
        %v949 = vpop.xlane.xlu0 %948
        %950 = vadd.xlane.f32.xlu0 %v920
        %v951 = vpop.xlane.xlu0 %950
        %952 = vadd.xlane.f32.xlu0 %v921
        %v953 = vpop.xlane.xlu0 %952
        %v954 = vmul.f32 %v923, 0.03125
        %v955 = vmul.f32 %v925, 0.03125
        %v956 = vmul.f32 %v927, 0.03125
        %v957 = vmul.f32 %v929, 0.03125
        %v958 = vmul.f32 %v931, 0.03125
        %v959 = vmul.f32 %v933, 0.03125
        %v960 = vmul.f32 %v935, 0.03125
        %v961 = vmul.f32 %v937, 0.03125
        %v962 = vmul.f32 %v939, 0.03125
        %v963 = vmul.f32 %v941, 0.03125
        %v964 = vmul.f32 %v943, 0.03125
        %v965 = vmul.f32 %v945, 0.03125
        %v966 = vmul.f32 %v947, 0.03125
        %v967 = vmul.f32 %v949, 0.03125
        %v968 = vmul.f32 %v951, 0.03125
        %v969 = vmul.f32 %v953, 0.03125
        %v970 = vmul.f32 %v890, %v890
        %v971 = vmul.f32 %v891, %v891
        %v972 = vmul.f32 %v892, %v892
        %v973 = vmul.f32 %v893, %v893
        %v974 = vmul.f32 %v894, %v894
        %v975 = vmul.f32 %v895, %v895
        %v976 = vmul.f32 %v896, %v896
        %v977 = vmul.f32 %v897, %v897
        %v978 = vmul.f32 %v898, %v898
        %v979 = vmul.f32 %v899, %v899
        %v980 = vmul.f32 %v900, %v900
        %v981 = vmul.f32 %v901, %v901
        %v982 = vmul.f32 %v902, %v902
        %v983 = vmul.f32 %v903, %v903
        %v984 = vmul.f32 %v904, %v904
        %v985 = vmul.f32 %v905, %v905
        %v986 = vsub.f32 %v954, %v970
        %v987 = vsub.f32 %v955, %v971
        %v988 = vsub.f32 %v956, %v972
        %v989 = vsub.f32 %v957, %v973
        %v990 = vsub.f32 %v958, %v974
        %v991 = vsub.f32 %v959, %v975
        %v992 = vsub.f32 %v960, %v976
        %v993 = vsub.f32 %v961, %v977
        %v994 = vsub.f32 %v962, %v978
        %v995 = vsub.f32 %v963, %v979
        %v996 = vsub.f32 %v964, %v980
        %v997 = vsub.f32 %v965, %v981
        %v998 = vsub.f32 %v966, %v982
        %v999 = vsub.f32 %v967, %v983
        %v1000 = vsub.f32 %v968, %v984
        %v1001 = vsub.f32 %v969, %v985
        %v1002 = vsub.f32 %v796, %v890
        %v1003 = vsub.f32 %v799, %v891
        %v1004 = vsub.f32 %v804, %v892
        %v1005 = vsub.f32 %v807, %v893
        %v1006 = vsub.f32 %v812, %v894
        %v1007 = vsub.f32 %v815, %v895
        %v1008 = vsub.f32 %v820, %v896
        %v1009 = vsub.f32 %v823, %v897
        %v1010 = vsub.f32 %v828, %v898
        %v1011 = vsub.f32 %v831, %v899
        %v1012 = vsub.f32 %v836, %v900
        %v1013 = vsub.f32 %v839, %v901
        %v1014 = vsub.f32 %v844, %v902
        %v1015 = vsub.f32 %v847, %v903
        %v1016 = vsub.f32 %v852, %v904
        %v1017 = vsub.f32 %v855, %v905
        %v1018 = vadd.f32 %v986, 1e-05
        %v1019 = vadd.f32 %v987, 1e-05
        %v1020 = vadd.f32 %v988, 1e-05
        %v1021 = vadd.f32 %v989, 1e-05
        %v1022 = vadd.f32 %v990, 1e-05
        %v1023 = vadd.f32 %v991, 1e-05
        %v1024 = vadd.f32 %v992, 1e-05
        %v1025 = vadd.f32 %v993, 1e-05
        %v1026 = vadd.f32 %v994, 1e-05
        %v1027 = vadd.f32 %v995, 1e-05
        %v1028 = vadd.f32 %v996, 1e-05
        %v1029 = vadd.f32 %v997, 1e-05
        %v1030 = vadd.f32 %v998, 1e-05
        %v1031 = vadd.f32 %v999, 1e-05
        %v1032 = vadd.f32 %v1000, 1e-05
        %v1033 = vadd.f32 %v1001, 1e-05
        %v1034 = vrsqrt.pop %v1018
        %v1035 = vrsqrt.pop %v1019
        %v1036 = vrsqrt.pop %v1020
        %v1037 = vrsqrt.pop %v1021
        %v1038 = vrsqrt.pop %v1022
        %v1039 = vrsqrt.pop %v1023
        %v1040 = vrsqrt.pop %v1024
        %v1041 = vrsqrt.pop %v1025
        %v1042 = vrsqrt.pop %v1026
        %v1043 = vrsqrt.pop %v1027
        %v1044 = vrsqrt.pop %v1028
        %v1045 = vrsqrt.pop %v1029
        %v1046 = vrsqrt.pop %v1030
        %v1047 = vrsqrt.pop %v1031
        %v1048 = vrsqrt.pop %v1032
        %v1049 = vrsqrt.pop %v1033
        %v1050 = vmul.f32 %v1002, %v1034
        %v1051 = vmul.f32 %v1003, %v1035
        %v1052 = vmul.f32 %v1004, %v1036
        %v1053 = vmul.f32 %v1005, %v1037
        %v1054 = vmul.f32 %v1006, %v1038
        %v1055 = vmul.f32 %v1007, %v1039
        %v1056 = vmul.f32 %v1008, %v1040
        %v1057 = vmul.f32 %v1009, %v1041
        %v1058 = vmul.f32 %v1010, %v1042
        %v1059 = vmul.f32 %v1011, %v1043
        %v1060 = vmul.f32 %v1012, %v1044
        %v1061 = vmul.f32 %v1013, %v1045
        %v1062 = vmul.f32 %v1014, %v1046
        %v1063 = vmul.f32 %v1015, %v1047
        %v1064 = vmul.f32 %v1016, %v1048
        %v1065 = vmul.f32 %v1017, %v1049
        %v1066 = vld [vmem:[%s5] sm:$0x1]
        %v1068 = vlaneseq
        %v1069 = vshrl.u32 %v1068, 7
        %v1070 = vsub.s32 0, %v1069
        %v1071 = vrot.slane %v1066, %v1070
        %v1073 = vmul.f32 %v1050, %v1071
        %v1074 = vmul.f32 %v1051, %v1071
        %v1075 = vmul.f32 %v1052, %v1071
        %v1076 = vmul.f32 %v1053, %v1071
        %v1077 = vmul.f32 %v1054, %v1071
        %v1078 = vmul.f32 %v1055, %v1071
        %v1079 = vmul.f32 %v1056, %v1071
        %v1080 = vmul.f32 %v1057, %v1071
        %v1081 = vmul.f32 %v1058, %v1071
        %v1082 = vmul.f32 %v1059, %v1071
        %v1083 = vmul.f32 %v1060, %v1071
        %v1084 = vmul.f32 %v1061, %v1071
        %v1085 = vmul.f32 %v1062, %v1071
        %v1086 = vmul.f32 %v1063, %v1071
        %v1087 = vmul.f32 %v1064, %v1071
        %v1088 = vmul.f32 %v1065, %v1071
        %v1089 = vld [vmem:[%s6] sm:$0x1]
        %v1091 = vlaneseq
        %v1092 = vshrl.u32 %v1091, 7
        %v1093 = vsub.s32 0, %v1092
        %v1094 = vrot.slane %v1089, %v1093
        %v1096 = vadd.f32 %v1073, %v1094
        %v1097 = vadd.f32 %v1074, %v1094
        %v1098 = vadd.f32 %v1075, %v1094
        %v1099 = vadd.f32 %v1076, %v1094
        %v1100 = vadd.f32 %v1077, %v1094
        %v1101 = vadd.f32 %v1078, %v1094
        %v1102 = vadd.f32 %v1079, %v1094
        %v1103 = vadd.f32 %v1080, %v1094
        %v1104 = vadd.f32 %v1081, %v1094
        %v1105 = vadd.f32 %v1082, %v1094
        %v1106 = vadd.f32 %v1083, %v1094
        %v1107 = vadd.f32 %v1084, %v1094
        %v1108 = vadd.f32 %v1085, %v1094
        %v1109 = vadd.f32 %v1086, %v1094
        %v1110 = vadd.f32 %v1087, %v1094
        %v1111 = vadd.f32 %v1088, %v1094
        %vm1112 = vcmp.ne.s32.totalorder %v319, 1
        %vm1113 = vcmp.ne.s32.totalorder %v320, 1
        %vm1114 = vcmp.ne.s32.totalorder %v321, 1
        %vm1115 = vcmp.ne.s32.totalorder %v322, 1
        %vm1116 = vcmp.ne.s32.totalorder %v323, 1
        %vm1117 = vcmp.ne.s32.totalorder %v324, 1
        %vm1118 = vcmp.ne.s32.totalorder %v325, 1
        %vm1119 = vcmp.ne.s32.totalorder %v326, 1
        %vm1120 = vcmp.ne.s32.totalorder %v327, 1
        %vm1121 = vcmp.ne.s32.totalorder %v328, 1
        %vm1122 = vcmp.ne.s32.totalorder %v329, 1
        %vm1123 = vcmp.ne.s32.totalorder %v330, 1
        %vm1124 = vcmp.ne.s32.totalorder %v331, 1
        %vm1125 = vcmp.ne.s32.totalorder %v332, 1
        %vm1126 = vcmp.ne.s32.totalorder %v333, 1
        %vm1127 = vcmp.ne.s32.totalorder %v334, 1
        %v1128 = vsel %vm1112, 1, 0
        %v1129 = vsel %vm1113, 1, 0
        %v1130 = vsel %vm1114, 1, 0
        %v1131 = vsel %vm1115, 1, 0
        %v1132 = vsel %vm1116, 1, 0
        %v1133 = vsel %vm1117, 1, 0
        %v1134 = vsel %vm1118, 1, 0
        %v1135 = vsel %vm1119, 1, 0
        %v1136 = vsel %vm1120, 1, 0
        %v1137 = vsel %vm1121, 1, 0
        %v1138 = vsel %vm1122, 1, 0
        %v1139 = vsel %vm1123, 1, 0
        %v1140 = vsel %vm1124, 1, 0
        %v1141 = vsel %vm1125, 1, 0
        %v1142 = vsel %vm1126, 1, 0
        %v1143 = vsel %vm1127, 1, 0
        %v1144 = vcvt.s32.f32 %v1128
        %v1145 = vcvt.s32.f32 %v1129
        %v1146 = vcvt.s32.f32 %v1130
        %v1147 = vcvt.s32.f32 %v1131
        %v1148 = vcvt.s32.f32 %v1132
        %v1149 = vcvt.s32.f32 %v1133
        %v1150 = vcvt.s32.f32 %v1134
        %v1151 = vcvt.s32.f32 %v1135
        %v1152 = vcvt.s32.f32 %v1136
        %v1153 = vcvt.s32.f32 %v1137
        %v1154 = vcvt.s32.f32 %v1138
        %v1155 = vcvt.s32.f32 %v1139
        %v1156 = vcvt.s32.f32 %v1140
        %v1157 = vcvt.s32.f32 %v1141
        %v1158 = vcvt.s32.f32 %v1142
        %v1159 = vcvt.s32.f32 %v1143
        %1161 = vset.pattern.permute.xlu0 0
        %1162 = vperm.xlu0 %1161, %v1144
        %v1163 = vpop.permute.xlu0 %1162
        %1166 = vset.pattern.permute.xlu0 0
        %1167 = vperm.xlu0 %1166, %v1145
        %v1168 = vpop.permute.xlu0 %1167
        %1171 = vset.pattern.permute.xlu0 0
        %1172 = vperm.xlu0 %1171, %v1146
        %v1173 = vpop.permute.xlu0 %1172
        %1176 = vset.pattern.permute.xlu0 0
        %1177 = vperm.xlu0 %1176, %v1147
        %v1178 = vpop.permute.xlu0 %1177
        %1181 = vset.pattern.permute.xlu0 0
        %1182 = vperm.xlu0 %1181, %v1148
        %v1183 = vpop.permute.xlu0 %1182
        %1186 = vset.pattern.permute.xlu0 0
        %1187 = vperm.xlu0 %1186, %v1149
        %v1188 = vpop.permute.xlu0 %1187
        %1191 = vset.pattern.permute.xlu0 0
        %1192 = vperm.xlu0 %1191, %v1150
        %v1193 = vpop.permute.xlu0 %1192
        %1196 = vset.pattern.permute.xlu0 0
        %1197 = vperm.xlu0 %1196, %v1151
        %v1198 = vpop.permute.xlu0 %1197
        %1201 = vset.pattern.permute.xlu0 0
        %1202 = vperm.xlu0 %1201, %v1152
        %v1203 = vpop.permute.xlu0 %1202
        %1206 = vset.pattern.permute.xlu0 0
        %1207 = vperm.xlu0 %1206, %v1153
        %v1208 = vpop.permute.xlu0 %1207
        %1211 = vset.pattern.permute.xlu0 0
        %1212 = vperm.xlu0 %1211, %v1154
        %v1213 = vpop.permute.xlu0 %1212
        %1216 = vset.pattern.permute.xlu0 0
        %1217 = vperm.xlu0 %1216, %v1155
        %v1218 = vpop.permute.xlu0 %1217
        %1221 = vset.pattern.permute.xlu0 0
        %1222 = vperm.xlu0 %1221, %v1156
        %v1223 = vpop.permute.xlu0 %1222
        %1226 = vset.pattern.permute.xlu0 0
        %1227 = vperm.xlu0 %1226, %v1157
        %v1228 = vpop.permute.xlu0 %1227
        %1231 = vset.pattern.permute.xlu0 0
        %1232 = vperm.xlu0 %1231, %v1158
        %v1233 = vpop.permute.xlu0 %1232
        %1236 = vset.pattern.permute.xlu0 0
        %1237 = vperm.xlu0 %1236, %v1159
        %v1238 = vpop.permute.xlu0 %1237
        %v1240 = vmul.f32 %v1096, %v1163
        %v1241 = vmul.f32 %v1097, %v1168
        %v1242 = vmul.f32 %v1098, %v1173
        %v1243 = vmul.f32 %v1099, %v1178
        %v1244 = vmul.f32 %v1100, %v1183
        %v1245 = vmul.f32 %v1101, %v1188
        %v1246 = vmul.f32 %v1102, %v1193
        %v1247 = vmul.f32 %v1103, %v1198
        %v1248 = vmul.f32 %v1104, %v1203
        %v1249 = vmul.f32 %v1105, %v1208
        %v1250 = vmul.f32 %v1106, %v1213
        %v1251 = vmul.f32 %v1107, %v1218
        %v1252 = vmul.f32 %v1108, %v1223
        %v1253 = vmul.f32 %v1109, %v1228
        %v1254 = vmul.f32 %v1110, %v1233
        %v1255 = vmul.f32 %v1111, %v1238
        %v1256 = vadd.f32 %v1240, %v1241
        %v1257 = vrot.slane %v1256, 4
        %v1258 = vadd.f32 %v1256, %v1257
        %v1259 = vrot.slane %v1258, 2
        %v1260 = vadd.f32 %v1258, %v1259
        %v1261 = vrot.slane %v1260, 1
        %v1262 = vadd.f32 %v1260, %v1261
        %v1263 = vadd.f32 %v1242, %v1243
        %v1264 = vrot.slane %v1263, 4
        %v1265 = vadd.f32 %v1263, %v1264
        %v1266 = vrot.slane %v1265, 2
        %v1267 = vadd.f32 %v1265, %v1266
        %v1268 = vrot.slane %v1267, 1
        %v1269 = vadd.f32 %v1267, %v1268
        %v1270 = vadd.f32 %v1244, %v1245
        %v1271 = vrot.slane %v1270, 4
        %v1272 = vadd.f32 %v1270, %v1271
        %v1273 = vrot.slane %v1272, 2
        %v1274 = vadd.f32 %v1272, %v1273
        %v1275 = vrot.slane %v1274, 1
        %v1276 = vadd.f32 %v1274, %v1275
        %v1277 = vadd.f32 %v1246, %v1247
        %v1278 = vrot.slane %v1277, 4
        %v1279 = vadd.f32 %v1277, %v1278
        %v1280 = vrot.slane %v1279, 2
        %v1281 = vadd.f32 %v1279, %v1280
        %v1282 = vrot.slane %v1281, 1
        %v1283 = vadd.f32 %v1281, %v1282
        %v1284 = vadd.f32 %v1248, %v1249
        %v1285 = vrot.slane %v1284, 4
        %v1286 = vadd.f32 %v1284, %v1285
        %v1287 = vrot.slane %v1286, 2
        %v1288 = vadd.f32 %v1286, %v1287
        %v1289 = vrot.slane %v1288, 1
        %v1290 = vadd.f32 %v1288, %v1289
        %v1291 = vadd.f32 %v1250, %v1251
        %v1292 = vrot.slane %v1291, 4
        %v1293 = vadd.f32 %v1291, %v1292
        %v1294 = vrot.slane %v1293, 2
        %v1295 = vadd.f32 %v1293, %v1294
        %v1296 = vrot.slane %v1295, 1
        %v1297 = vadd.f32 %v1295, %v1296
        %v1298 = vadd.f32 %v1252, %v1253
        %v1299 = vrot.slane %v1298, 4
        %v1300 = vadd.f32 %v1298, %v1299
        %v1301 = vrot.slane %v1300, 2
        %v1302 = vadd.f32 %v1300, %v1301
        %v1303 = vrot.slane %v1302, 1
        %v1304 = vadd.f32 %v1302, %v1303
        %v1305 = vadd.f32 %v1254, %v1255
        %v1306 = vrot.slane %v1305, 4
        %v1307 = vadd.f32 %v1305, %v1306
        %v1308 = vrot.slane %v1307, 2
        %v1309 = vadd.f32 %v1307, %v1308
        %v1310 = vrot.slane %v1309, 1
        %v1311 = vadd.f32 %v1309, %v1310
        %v1312 = vld [vmem:[%s317] sm:$0xff]
        %v1313 = vrcp.pop %v1312
        %1315 = vset.pattern.permute.xlu0 0
        %1316 = vperm.xlu0 %1315, %v1313
        %v1317 = vpop.permute.xlu0 %1316
        %v1318 = vrot.slane %v1317, 1
        %v1319 = vrot.slane %v1317, 2
        %v1320 = vrot.slane %v1317, 3
        %v1321 = vrot.slane %v1317, 4
        %v1322 = vrot.slane %v1317, 5
        %v1323 = vrot.slane %v1317, 6
        %v1324 = vrot.slane %v1317, 7
        %v1333 = vmul.f32 %v1262, %v1317
        %v1334 = vmul.f32 %v1269, %v1318
        %v1335 = vmul.f32 %v1276, %v1319
        %v1336 = vmul.f32 %v1283, %v1320
        %v1337 = vmul.f32 %v1290, %v1321
        %v1338 = vmul.f32 %v1297, %v1322
        %v1339 = vmul.f32 %v1304, %v1323
        %v1340 = vmul.f32 %v1311, %v1324
        %v1349 = vrot.slane %v1334, 7
        %vm1350 = vcmask 1041409
        %v1351 = vsel %vm1350, %v1349, %v1333
        %v1352 = vrot.slane %v1335, 6
        %vm1353 = vcmask 1042434
        %v1354 = vsel %vm1353, %v1352, %v1351
        %v1355 = vrot.slane %v1336, 5
        %vm1356 = vcmask 1043459
        %v1357 = vsel %vm1356, %v1355, %v1354
        %v1358 = vrot.slane %v1337, 4
        %vm1359 = vcmask 1044484
        %v1360 = vsel %vm1359, %v1358, %v1357
        %v1361 = vrot.slane %v1338, 3
        %vm1362 = vcmask 1045509
        %v1363 = vsel %vm1362, %v1361, %v1360
        %v1364 = vrot.slane %v1339, 2
        %vm1365 = vcmask 1046534
        %v1366 = vsel %vm1365, %v1364, %v1363
        %v1367 = vrot.slane %v1340, 1
        %vm1368 = vcmask 1047559
        %v1369 = vsel %vm1368, %v1367, %v1366
        %1371 = vst [vmem:[%s301] sm:$0xff] %v1369
        %s1372 = sand.u32 %s191, 1
        %s1373 = scalar_lea.sflag [#allocation3], %s1372
        %s1374 = sand.u32 %s191, 1
        %s1375 = smul.addr %s1374, 8
        %s1376 = scalar_lea.vmem [#allocation2], %s1375
        // Predicated region
        $region49: #{tpu_custom_call.1} parent=47 // pred_check
          %p1377 = pneg %p201
        $region50: #{tpu_custom_call.1} parent=47 // pred_check_branch
          %1379 = sbr.rel (%p1377) target = $region52
        $region51: #{tpu_custom_call.1} parent=47 // pred_region
          %s1381 = ssub.s32 128, 128
          %1382 = vsyncadd %s1373, %s1381
          %s1383 = smul.addr %s21, 128
          %s1384 = scalar_lea.hbm %s7, %s1383
          %s1386 = sshll.u32 %s1376, 4
          %s1387 = int_to_ptr.vmem [resolvable:$true] %s1386
          %1389 = dma.vmem_to_hbm [thread:$0]  %s1387, 128, %s1384, %s1373
        $region52: #{tpu_custom_call.1} parent=47 // pred_fallthru
          _
      $region48: #{tpu_custom_call.1} parent=5 // pred_fallthru
        _
      %p1390 = scmp.le.s32.totalorder 2, %s16
      // Predicated region
      $region53: #{tpu_custom_call.1} parent=5 // pred_check
        %p1391 = pneg %p1390
      $region54: #{tpu_custom_call.1} parent=5 // pred_check_branch
        %1393 = sbr.rel (%p1391) target = $region56
      $region55: #{tpu_custom_call.1} parent=5 // pred_region
        %s1394 = ssub.s32 %s16, 2
        // Predicated region
        $region57: #{tpu_custom_call.1} parent=55 // pred_check
          %p1395 = pneg %p207
        $region58: #{tpu_custom_call.1} parent=55 // pred_check_branch
          %1397 = sbr.rel (%p1395) target = $region60
        $region59: #{tpu_custom_call.1} parent=55 // pred_region
          %s1398 = sand.u32 %s192, 1
          %s1399 = scalar_lea.sflag [#allocation3], %s1398
          %s1400 = sand.u32 %s192, 1
          %s1401 = smul.addr %s1400, 8
          %s1402 = scalar_lea.vmem [#allocation2], %s1401
          %1403 = dma.done %s1399, 128
        $region60: #{tpu_custom_call.1} parent=55 // pred_fallthru
          _
      $region56: #{tpu_custom_call.1} parent=5 // pred_fallthru
        _
    $region6: #{tpu_custom_call.1} parent=1 // loop_footer
      %s20 = sadd.s32 1, %s16
    $region7: #{tpu_custom_call.1} parent=1 // loop_footer_branch
      %15 = sbr.rel target = $region3
    $region8: #{tpu_custom_call.1} parent=1 // loop_exit
      _
    %1404 = vsyncpa [#allocation3], 1
    %s1405 = scalar_lea.sflag [#allocation3], 1
    %1406 = vsyncpa %s1405, 1

</llo_original>
